<compile_context>
chip_gen: v6e
topology: v6e:2x2x1
jax: 0.10.0
libtpu: 0.0.40
codegen_flags: <defaults>
</compile_context>

<pallas_src>
import jax
import jax.numpy as jnp
from jax.experimental import pallas as pl
from jax.experimental.pallas import tpu as pltpu

H1, H2 = 400, 300           # logical hidden sizes (match nn.Linear spec)
H1P, H2P = 512, 384         # lane-padded hidden sizes (multiples of 128)

# Fused small-parameter column layout: [ b1 | b2 | w3 | b3 ] (zero padded).
_B1_OFF = 0
_B2_OFF = H1P
_W3_OFF = H1P + H2P
_B3_OFF = H1P + 2 * H2P
PTOT = H1P + 2 * H2P + 8    # 1288 rows; all slice offsets are multiples of 8


def _round_up(x, m):
    return (x + m - 1) // m * m


def value_kernel(xt_ref, w1_ref, w2_ref, p_ref, o_ref):
    # Static, sublane-aligned slices of the fused parameter column (free).
    b1 = p_ref[_B1_OFF:_B1_OFF + H1P, :]          # (H1P, 1) f32
    b2 = p_ref[_B2_OFF:_B2_OFF + H2P, :]          # (H2P, 1) f32
    w3 = p_ref[_W3_OFF:_W3_OFF + H2P, :]          # (H2P, 1) f32
    b3 = p_ref[_B3_OFF:_B3_OFF + 1, :]            # (1, 1)   f32

    # l1 + ReLU: bf16 MXU matmul, f32 accumulation, f32 bias/ReLU.
    xt = xt_ref[...].astype(jnp.bfloat16)                         # (SD, tm)
    h1 = jnp.dot(w1_ref[...], xt, preferred_element_type=jnp.float32)
    h1 = jnp.maximum(h1 + b1, 0.0)                                # (H1P, tm)

    # l2 + ReLU
    h2 = jnp.dot(w2_ref[...], h1.astype(jnp.bfloat16),
                 preferred_element_type=jnp.float32)
    h2 = jnp.maximum(h2 + b2, 0.0)                                # (H2P, tm)

    # l3 (out_features == 1): VPU multiply + sublane (XLU) reduction directly
    # produces the lane-dense (1, tm) row — no MXU round-trip, no relayout.
    q = jnp.sum(h2 * w3, axis=0, keepdims=True)                   # (1, tm)
    o_ref[...] = (q + b3).astype(o_ref.dtype)


def value_forward(state, packed_params, *, tm=None):
    """state: [B, state_dim] f32 -> [B, 1] f32 (matches PyTorch Value.forward)."""
    w1p, w2p, pvec = packed_params
    B, state_dim = state.shape

    # Batch tile: lane-dense (multiple of 128), as fat as reasonable.  Cap at
    # 1024: amortizes per-step overhead while keeping peak VMEM ~9 MB (safe on
    # v5e's 16 MiB scoped default); large B still yields >=2 grid steps so the
    # "parallel" axis shards across v7x's 2 TensorCores.
    if tm is None:
        tm = 1024
    tm = max(128, min(_round_up(tm, 128), _round_up(B, 128)))
    Bp = _round_up(B, tm)
    grid_m = Bp // tm

    # Layout plumbing only: put the batch on the lane axis and zero-pad it.
    xt = jnp.pad(state.T, ((0, 0), (0, Bp - B)))                  # (SD, Bp)

    flops = 2 * Bp * (state_dim * H1P + H1P * H2P + H2P)
    bytes_accessed = (Bp * state_dim * 4 + Bp * 4
                      + w1p.size * 2 + w2p.size * 2 + pvec.size * 4)

    const = lambda shape: pl.BlockSpec(shape, lambda i: (0, 0))
    out = pl.pallas_call(
        value_kernel,
        out_shape=jax.ShapeDtypeStruct((1, Bp), jnp.float32),
        grid=(grid_m,),
        in_specs=[
            pl.BlockSpec((state_dim, tm), lambda i: (0, i)),      # state^T tile
            const((H1P, state_dim)),                              # W1 (bf16, resident)
            const((H2P, H1P)),                                    # W2 (bf16, resident)
            const((PTOT, 1)),                                     # fused b1|b2|w3|b3
        ],
        out_specs=pl.BlockSpec((1, tm), lambda i: (0, i)),        # lane-dense output
        compiler_params=pltpu.CompilerParams(
            dimension_semantics=("parallel",)),
        cost_estimate=pl.CostEstimate(
            flops=flops, transcendentals=0, bytes_accessed=bytes_accessed),
    )(xt, w1p, w2p, pvec)

    return out[0, :B].reshape(B, 1)


def init_params(key, state_dim):
    """nn.Linear-style params: w [out, in], b [out], U(-1/sqrt(fan_in), ...)."""
    dims = [(state_dim, H1), (H1, H2), (H2, 1)]
    params = []
    for fan_in, fan_out in dims:
        key, kw, kb = jax.random.split(key, 3)
        bound = float(fan_in) ** -0.5
        w = jax.random.uniform(kw, (fan_out, fan_in), jnp.float32, -bound, bound)
        b = jax.random.uniform(kb, (fan_out,), jnp.float32, -bound, bound)
        params += [w, b]
    return tuple(params)


def pack_params(params):
    """PyTorch [out, in] weights -> zero-padded bf16 big weights + one fused
    f32 parameter column.  Zero padding is exact: padded h1/h2 rows stay 0
    through matmul+bias+ReLU and padded w3 entries contribute 0."""
    w1, b1, w2, b2, w3, b3 = params
    state_dim = w1.shape[1]
    w1p = jnp.zeros((H1P, state_dim), jnp.bfloat16).at[:H1, :].set(
        w1.astype(jnp.bfloat16))
    w2p = jnp.zeros((H2P, H1P), jnp.bfloat16).at[:H2, :H1].set(
        w2.astype(jnp.bfloat16))
    pvec = jnp.zeros((PTOT, 1), jnp.float32)
    pvec = pvec.at[_B1_OFF:_B1_OFF + H1, 0].set(b1)
    pvec = pvec.at[_B2_OFF:_B2_OFF + H2, 0].set(b2)
    pvec = pvec.at[_W3_OFF:_W3_OFF + H2, 0].set(w3[0])            # w3 is (1, 300)
    pvec = pvec.at[_B3_OFF, 0].set(b3[0])
    return (w1p, w2p, pvec)


def value_reference(state, params):
    """Plain-JAX f32 reference of the PyTorch forward."""
    w1, b1, w2, b2, w3, b3 = params
    h1 = jnp.maximum(state @ w1.T + b1, 0.0)
    h2 = jnp.maximum(h1 @ w2.T + b2, 0.0)
    return h2 @ w3.T + b3


def value_reference_bf16(state, params):
    """Reference with the same bf16-weight / f32-accumulate quantization the
    kernel uses (tight correctness check for the kernel itself)."""
    w1, b1, w2, b2, w3, b3 = params
    x = state.astype(jnp.bfloat16)
    h1 = jnp.dot(x, w1.T.astype(jnp.bfloat16),
                 preferred_element_type=jnp.float32)
    h1 = jnp.maximum(h1 + b1, 0.0)
    h2 = jnp.dot(h1.astype(jnp.bfloat16), w2.T.astype(jnp.bfloat16),
                 preferred_element_type=jnp.float32)
    h2 = jnp.maximum(h2 + b2, 0.0)
    return h2 @ w3.T + b3


if __name__ == "__main__":
    key = jax.random.PRNGKey(0)
    key, k_state, k_big = jax.random.split(key, 3)

    B, state_dim = 8, 32
    state = jax.random.normal(k_state, (B, state_dim), jnp.float32)
    params = init_params(key, state_dim)
    packed = pack_params(params)

    # Small-batch run (single grid step, heavy batch padding).
    out = jax.block_until_ready(value_forward(state, packed))
    assert out.shape == (B, 1), out.shape
    ref_q = value_reference_bf16(state, params)
    ref_f = value_reference(state, params)
    assert jnp.allclose(out, ref_q, atol=2e-3, rtol=2e-3), (
        float(jnp.max(jnp.abs(out - ref_q))))
    assert jnp.allclose(out, ref_f, atol=1e-1, rtol=1e-1), (
        float(jnp.max(jnp.abs(out - ref_f))))

    # Larger batch: multiple grid steps (tm=1024) + ragged tail padding.
    B2 = 3000
    state_big = jax.random.normal(k_big, (B2, state_dim), jnp.float32)
    out_big = jax.block_until_ready(value_forward(state_big, packed))
    assert out_big.shape == (B2, 1), out_big.shape
    ref_big = value_reference_bf16(state_big, params)
    assert jnp.allclose(out_big, ref_big, atol=2e-3, rtol=2e-3), (
        float(jnp.max(jnp.abs(out_big - ref_big))))

    print("KERNEL_OK")
</pallas_src>

<mosaic_0001>
module attributes {stable_mosaic.version = 11 : i64} {
  func.func @value_kernel(%arg0: i32, %arg1: memref<32x128xf32, #tpu.memory_space<vmem>>, %arg2: memref<512x32xbf16, #tpu.memory_space<vmem>>, %arg3: memref<384x512xbf16, #tpu.memory_space<vmem>>, %arg4: memref<1288x1xf32, #tpu.memory_space<vmem>>, %arg5: memref<1x128xf32, #tpu.memory_space<vmem>>) attributes {dimension_semantics = [#tpu.dimension_semantics<parallel>], iteration_bounds = array<i64: 1>, scalar_prefetch = 0 : i64, scratch_operands = 0 : i64, tpu.core_type = #tpu.core_type<tc>, window_params = [{transform_indices = @transform_0, window_bounds = array<i64: 32, 128>}, {pipeline_mode = #tpu.pipeline_mode<synchronous>, transform_indices = @transform_1, window_bounds = array<i64: 512, 32>}, {pipeline_mode = #tpu.pipeline_mode<synchronous>, transform_indices = @transform_2, window_bounds = array<i64: 384, 512>}, {pipeline_mode = #tpu.pipeline_mode<synchronous>, transform_indices = @transform_3, window_bounds = array<i64: 1288, 1>}, {transform_indices = @transform_4, window_bounds = array<i64: 1, 128>}]} {
    %c0 = arith.constant 0 : index
    %c0_0 = arith.constant 0 : index
    %0 = vector.load %arg4[%c0, %c0_0] : memref<1288x1xf32, #tpu.memory_space<vmem>>, vector<512x1xf32>
    %c512 = arith.constant 512 : index
    %c0_1 = arith.constant 0 : index
    %1 = vector.load %arg4[%c512, %c0_1] : memref<1288x1xf32, #tpu.memory_space<vmem>>, vector<384x1xf32>
    %c896 = arith.constant 896 : index
    %c0_2 = arith.constant 0 : index
    %2 = vector.load %arg4[%c896, %c0_2] : memref<1288x1xf32, #tpu.memory_space<vmem>>, vector<384x1xf32>
    %c1280 = arith.constant 1280 : index
    %c0_3 = arith.constant 0 : index
    %3 = vector.load %arg4[%c1280, %c0_3] : memref<1288x1xf32, #tpu.memory_space<vmem>>, vector<1x1xf32>
    %c0_4 = arith.constant 0 : index
    %c0_5 = arith.constant 0 : index
    %4 = vector.load %arg1[%c0_4, %c0_5] : memref<32x128xf32, #tpu.memory_space<vmem>>, vector<32x128xf32>
    %5 = arith.truncf %4 : vector<32x128xf32> to vector<32x128xbf16>
    %c0_6 = arith.constant 0 : index
    %c0_7 = arith.constant 0 : index
    %6 = vector.load %arg2[%c0_6, %c0_7] : memref<512x32xbf16, #tpu.memory_space<vmem>>, vector<512x32xbf16>
    %cst = arith.constant dense<0.000000e+00> : vector<512x128xf32>
    %7 = tpu.matmul %6, %5, %cst {dimension_numbers = #tpu.dot_dimension_numbers<[1], [0], [0], [1], [0, 0, 1, 1], [], []>} : vector<512x32xbf16>, vector<32x128xbf16>, vector<512x128xf32> -> vector<512x128xf32>
    %8 = vector.broadcast %0 : vector<512x1xf32> to vector<512x128xf32>
    %9 = arith.addf %7, %8 : vector<512x128xf32>
    %cst_8 = arith.constant 0.000000e+00 : f32
    %10 = vector.broadcast %cst_8 : f32 to vector<512x128xf32>
    %11 = arith.maximumf %9, %10 : vector<512x128xf32>
    %c0_9 = arith.constant 0 : index
    %c0_10 = arith.constant 0 : index
    %12 = vector.load %arg3[%c0_9, %c0_10] : memref<384x512xbf16, #tpu.memory_space<vmem>>, vector<384x512xbf16>
    %13 = arith.truncf %11 : vector<512x128xf32> to vector<512x128xbf16>
    %cst_11 = arith.constant dense<0.000000e+00> : vector<384x128xf32>
    %14 = tpu.matmul %12, %13, %cst_11 {dimension_numbers = #tpu.dot_dimension_numbers<[1], [0], [0], [1], [0, 0, 1, 1], [], []>} : vector<384x512xbf16>, vector<512x128xbf16>, vector<384x128xf32> -> vector<384x128xf32>
    %15 = vector.broadcast %1 : vector<384x1xf32> to vector<384x128xf32>
    %16 = arith.addf %14, %15 : vector<384x128xf32>
    %cst_12 = arith.constant 0.000000e+00 : f32
    %17 = vector.broadcast %cst_12 : f32 to vector<384x128xf32>
    %18 = arith.maximumf %16, %17 : vector<384x128xf32>
    %19 = vector.broadcast %2 : vector<384x1xf32> to vector<384x128xf32>
    %20 = arith.mulf %18, %19 : vector<384x128xf32>
    %cst_13 = arith.constant dense<0.000000e+00> : vector<128xf32>
    %21 = vector.multi_reduction <add>, %20, %cst_13 [0] : vector<384x128xf32> to vector<128xf32>
    %22 = vector.shape_cast %21 : vector<128xf32> to vector<1x128xf32>
    %23 = vector.broadcast %3 : vector<1x1xf32> to vector<1x128xf32>
    %24 = arith.addf %22, %23 : vector<1x128xf32>
    %c0_14 = arith.constant 0 : index
    %c0_15 = arith.constant 0 : index
    %25 = vector.load %arg5[%c0_14, %c0_15] : memref<1x128xf32, #tpu.memory_space<vmem>>, vector<1x128xf32>
    tpu.vector_store %arg5[%c0_14, %c0_15], %24 {strides = array<i32>} : memref<1x128xf32, #tpu.memory_space<vmem>>, vector<1x128xf32>,
    return
  }
  func.func @transform_0(%arg0: i32) -> (i32, i32) {
    %c0_i32 = arith.constant 0 : i32
    %c0_i32_0 = arith.constant 0 : i32
    return %c0_i32, %arg0 : i32, i32
  }
  func.func @transform_1(%arg0: i32) -> (i32, i32) {
    %c0_i32 = arith.constant 0 : i32
    %c0_i32_0 = arith.constant 0 : i32
    %c0_i32_1 = arith.constant 0 : i32
    return %c0_i32, %c0_i32_0 : i32, i32
  }
  func.func @transform_2(%arg0: i32) -> (i32, i32) {
    %c0_i32 = arith.constant 0 : i32
    %c0_i32_0 = arith.constant 0 : i32
    %c0_i32_1 = arith.constant 0 : i32
    return %c0_i32, %c0_i32_0 : i32, i32
  }
  func.func @transform_3(%arg0: i32) -> (i32, i32) {
    %c0_i32 = arith.constant 0 : i32
    %c0_i32_0 = arith.constant 0 : i32
    %c0_i32_1 = arith.constant 0 : i32
    return %c0_i32, %c0_i32_0 : i32, i32
  }
  func.func @transform_4(%arg0: i32) -> (i32, i32) {
    %c0_i32 = arith.constant 0 : i32
    %c0_i32_0 = arith.constant 0 : i32
    return %c0_i32, %arg0 : i32, i32
  }
}

</mosaic_0001>

<llo_original>
// kernel: tpu_custom_call.1
$region0: #{tpu_custom_call.1}
  #allocation0 [shape = 'u32[]', space=smem, size = 0x4, offset = 0x4, fixed_abs, tag = 'smem constant byte address 0x4 - core index']
  #allocation1 [shape = 'u32[144,128]{1,0:T(1,128)}', space=vmem, size = 0x12000, scoped, tag = 'internal scratch']
  %s0 = inlined_call_operand.vmem [shape: f32[32,128], index: 0, kind: input, shape index: {}]
  %s1 = inlined_call_operand.vmem [shape: bf16[512,32], index: 1, kind: input, shape index: {}]
  %s2 = inlined_call_operand.vmem [shape: bf16[384,512], index: 2, kind: input, shape index: {}]
  %s3 = inlined_call_operand.vmem [shape: f32[1288,1], index: 3, kind: input, shape index: {}]
  %s4 = inlined_call_operand.hbm [shape: f32[1,128], index: 4, kind: output, shape index: {}]
  %s5 = sld [smem:[#allocation0]]
  $region26: #{tpu_custom_call.1} parent=0
    _
  %s7 = ssub.s32 1, %s5
  %s8 = scalar_select 0, %s7, %s5
  $region1: #{tpu_custom_call.1} parent=0
    #allocation2 [shape = 'u8[512]{0}', space=vmem, size = 0x400, scoped, tag = 'output window, operand 0, single buffered']
    #allocation3 [shape = 's32[1]{0}', space=sflag, size = 0x4, scoped, tag = 'scoped memory for tpu_custom_call.1']
    %9 = vsyncpa [#allocation3], 0
    // Predicated region
    $region2: #{tpu_custom_call.1} parent=1 // pred_check
      _
    $region3: #{tpu_custom_call.1} parent=1 // pred_check_branch
      %11 = sbr.rel (0) target = $region5
    $region4: #{tpu_custom_call.1} parent=1 // pred_region
      _
    $region5: #{tpu_custom_call.1} parent=1 // pred_fallthru
      _
    // Predicated region
    $region6: #{tpu_custom_call.1} parent=1 // pred_check
      _
    $region7: #{tpu_custom_call.1} parent=1 // pred_check_branch
      %13 = sbr.rel (0) target = $region9
    $region8: #{tpu_custom_call.1} parent=1 // pred_region
      _
    $region9: #{tpu_custom_call.1} parent=1 // pred_fallthru
      _
    // Predicated region
    $region10: #{tpu_custom_call.1} parent=1 // pred_check
      _
    $region11: #{tpu_custom_call.1} parent=1 // pred_check_branch
      %15 = sbr.rel (0) target = $region13
    $region12: #{tpu_custom_call.1} parent=1 // pred_region
      _
    $region13: #{tpu_custom_call.1} parent=1 // pred_fallthru
      _
    // Predicated region
    $region14: #{tpu_custom_call.1} parent=1 // pred_check
      _
    $region15: #{tpu_custom_call.1} parent=1 // pred_check_branch
      %17 = sbr.rel (0) target = $region17
    $region16: #{tpu_custom_call.1} parent=1 // pred_region
      _
    $region17: #{tpu_custom_call.1} parent=1 // pred_fallthru
      _
    %v19 = vld [vmem:[%s3] sm:$0xff]
    %v20 = vld [vmem:[%s3 + $0x8] sm:$0xff]
    %v21 = vld [vmem:[%s3 + $0x10] sm:$0xff]
    %v22 = vld [vmem:[%s3 + $0x18] sm:$0xff]
    %v23 = vld [vmem:[%s3 + $0x20] sm:$0xff]
    %v24 = vld [vmem:[%s3 + $0x28] sm:$0xff]
    %v25 = vld [vmem:[%s3 + $0x30] sm:$0xff]
    %v26 = vld [vmem:[%s3 + $0x38] sm:$0xff]
    %v27 = vld [vmem:[%s3 + $0x40] sm:$0xff]
    %v28 = vld [vmem:[%s3 + $0x48] sm:$0xff]
    %v29 = vld [vmem:[%s3 + $0x50] sm:$0xff]
    %v30 = vld [vmem:[%s3 + $0x58] sm:$0xff]
    %v31 = vld [vmem:[%s3 + $0x60] sm:$0xff]
    %v32 = vld [vmem:[%s3 + $0x68] sm:$0xff]
    %v33 = vld [vmem:[%s3 + $0x70] sm:$0xff]
    %v34 = vld [vmem:[%s3 + $0x78] sm:$0xff]
    %v35 = vld [vmem:[%s3 + $0x80] sm:$0xff]
    %v36 = vld [vmem:[%s3 + $0x88] sm:$0xff]
    %v37 = vld [vmem:[%s3 + $0x90] sm:$0xff]
    %v38 = vld [vmem:[%s3 + $0x98] sm:$0xff]
    %v39 = vld [vmem:[%s3 + $0xa0] sm:$0xff]
    %v40 = vld [vmem:[%s3 + $0xa8] sm:$0xff]
    %v41 = vld [vmem:[%s3 + $0xb0] sm:$0xff]
    %v42 = vld [vmem:[%s3 + $0xb8] sm:$0xff]
    %v43 = vld [vmem:[%s3 + $0xc0] sm:$0xff]
    %v44 = vld [vmem:[%s3 + $0xc8] sm:$0xff]
    %v45 = vld [vmem:[%s3 + $0xd0] sm:$0xff]
    %v46 = vld [vmem:[%s3 + $0xd8] sm:$0xff]
    %v47 = vld [vmem:[%s3 + $0xe0] sm:$0xff]
    %v48 = vld [vmem:[%s3 + $0xe8] sm:$0xff]
    %v49 = vld [vmem:[%s3 + $0xf0] sm:$0xff]
    %v50 = vld [vmem:[%s3 + $0xf8] sm:$0xff]
    %v51 = vld [vmem:[%s3 + $0x100] sm:$0xff]
    %v52 = vld [vmem:[%s3 + $0x108] sm:$0xff]
    %v53 = vld [vmem:[%s3 + $0x110] sm:$0xff]
    %v54 = vld [vmem:[%s3 + $0x118] sm:$0xff]
    %v55 = vld [vmem:[%s3 + $0x120] sm:$0xff]
    %v56 = vld [vmem:[%s3 + $0x128] sm:$0xff]
    %v57 = vld [vmem:[%s3 + $0x130] sm:$0xff]
    %v58 = vld [vmem:[%s3 + $0x138] sm:$0xff]
    %v59 = vld [vmem:[%s3 + $0x140] sm:$0xff]
    %v60 = vld [vmem:[%s3 + $0x148] sm:$0xff]
    %v61 = vld [vmem:[%s3 + $0x150] sm:$0xff]
    %v62 = vld [vmem:[%s3 + $0x158] sm:$0xff]
    %v63 = vld [vmem:[%s3 + $0x160] sm:$0xff]
    %v64 = vld [vmem:[%s3 + $0x168] sm:$0xff]
    %v65 = vld [vmem:[%s3 + $0x170] sm:$0xff]
    %v66 = vld [vmem:[%s3 + $0x178] sm:$0xff]
    %v67 = vld [vmem:[%s3 + $0x180] sm:$0xff]
    %v68 = vld [vmem:[%s3 + $0x188] sm:$0xff]
    %v69 = vld [vmem:[%s3 + $0x190] sm:$0xff]
    %v70 = vld [vmem:[%s3 + $0x198] sm:$0xff]
    %v71 = vld [vmem:[%s3 + $0x1a0] sm:$0xff]
    %v72 = vld [vmem:[%s3 + $0x1a8] sm:$0xff]
    %v73 = vld [vmem:[%s3 + $0x1b0] sm:$0xff]
    %v74 = vld [vmem:[%s3 + $0x1b8] sm:$0xff]
    %v75 = vld [vmem:[%s3 + $0x1c0] sm:$0xff]
    %v76 = vld [vmem:[%s3 + $0x1c8] sm:$0xff]
    %v77 = vld [vmem:[%s3 + $0x1d0] sm:$0xff]
    %v78 = vld [vmem:[%s3 + $0x1d8] sm:$0xff]
    %v79 = vld [vmem:[%s3 + $0x1e0] sm:$0xff]
    %v80 = vld [vmem:[%s3 + $0x1e8] sm:$0xff]
    %v81 = vld [vmem:[%s3 + $0x1f0] sm:$0xff]
    %v82 = vld [vmem:[%s3 + $0x1f8] sm:$0xff]
    %v83 = vld [vmem:[%s3 + $0x200] sm:$0xff]
    %v84 = vld [vmem:[%s3 + $0x208] sm:$0xff]
    %v85 = vld [vmem:[%s3 + $0x210] sm:$0xff]
    %v86 = vld [vmem:[%s3 + $0x218] sm:$0xff]
    %v87 = vld [vmem:[%s3 + $0x220] sm:$0xff]
    %v88 = vld [vmem:[%s3 + $0x228] sm:$0xff]
    %v89 = vld [vmem:[%s3 + $0x230] sm:$0xff]
    %v90 = vld [vmem:[%s3 + $0x238] sm:$0xff]
    %v91 = vld [vmem:[%s3 + $0x240] sm:$0xff]
    %v92 = vld [vmem:[%s3 + $0x248] sm:$0xff]
    %v93 = vld [vmem:[%s3 + $0x250] sm:$0xff]
    %v94 = vld [vmem:[%s3 + $0x258] sm:$0xff]
    %v95 = vld [vmem:[%s3 + $0x260] sm:$0xff]
    %v96 = vld [vmem:[%s3 + $0x268] sm:$0xff]
    %v97 = vld [vmem:[%s3 + $0x270] sm:$0xff]
    %v98 = vld [vmem:[%s3 + $0x278] sm:$0xff]
    %v99 = vld [vmem:[%s3 + $0x280] sm:$0xff]
    %v100 = vld [vmem:[%s3 + $0x288] sm:$0xff]
    %v101 = vld [vmem:[%s3 + $0x290] sm:$0xff]
    %v102 = vld [vmem:[%s3 + $0x298] sm:$0xff]
    %v103 = vld [vmem:[%s3 + $0x2a0] sm:$0xff]
    %v104 = vld [vmem:[%s3 + $0x2a8] sm:$0xff]
    %v105 = vld [vmem:[%s3 + $0x2b0] sm:$0xff]
    %v106 = vld [vmem:[%s3 + $0x2b8] sm:$0xff]
    %v107 = vld [vmem:[%s3 + $0x2c0] sm:$0xff]
    %v108 = vld [vmem:[%s3 + $0x2c8] sm:$0xff]
    %v109 = vld [vmem:[%s3 + $0x2d0] sm:$0xff]
    %v110 = vld [vmem:[%s3 + $0x2d8] sm:$0xff]
    %v111 = vld [vmem:[%s3 + $0x2e0] sm:$0xff]
    %v112 = vld [vmem:[%s3 + $0x2e8] sm:$0xff]
    %v113 = vld [vmem:[%s3 + $0x2f0] sm:$0xff]
    %v114 = vld [vmem:[%s3 + $0x2f8] sm:$0xff]
    %v115 = vld [vmem:[%s3 + $0x300] sm:$0xff]
    %v116 = vld [vmem:[%s3 + $0x308] sm:$0xff]
    %v117 = vld [vmem:[%s3 + $0x310] sm:$0xff]
    %v118 = vld [vmem:[%s3 + $0x318] sm:$0xff]
    %v119 = vld [vmem:[%s3 + $0x320] sm:$0xff]
    %v120 = vld [vmem:[%s3 + $0x328] sm:$0xff]
    %v121 = vld [vmem:[%s3 + $0x330] sm:$0xff]
    %v122 = vld [vmem:[%s3 + $0x338] sm:$0xff]
    %v123 = vld [vmem:[%s3 + $0x340] sm:$0xff]
    %v124 = vld [vmem:[%s3 + $0x348] sm:$0xff]
    %v125 = vld [vmem:[%s3 + $0x350] sm:$0xff]
    %v126 = vld [vmem:[%s3 + $0x358] sm:$0xff]
    %v127 = vld [vmem:[%s3 + $0x360] sm:$0xff]
    %v128 = vld [vmem:[%s3 + $0x368] sm:$0xff]
    %v129 = vld [vmem:[%s3 + $0x370] sm:$0xff]
    %v130 = vld [vmem:[%s3 + $0x378] sm:$0xff]
    %v131 = vld [vmem:[%s3 + $0x380] sm:$0xff]
    %v132 = vld [vmem:[%s3 + $0x388] sm:$0xff]
    %v133 = vld [vmem:[%s3 + $0x390] sm:$0xff]
    %v134 = vld [vmem:[%s3 + $0x398] sm:$0xff]
    %v135 = vld [vmem:[%s3 + $0x3a0] sm:$0xff]
    %v136 = vld [vmem:[%s3 + $0x3a8] sm:$0xff]
    %v137 = vld [vmem:[%s3 + $0x3b0] sm:$0xff]
    %v138 = vld [vmem:[%s3 + $0x3b8] sm:$0xff]
    %v139 = vld [vmem:[%s3 + $0x3c0] sm:$0xff]
    %v140 = vld [vmem:[%s3 + $0x3c8] sm:$0xff]
    %v141 = vld [vmem:[%s3 + $0x3d0] sm:$0xff]
    %v142 = vld [vmem:[%s3 + $0x3d8] sm:$0xff]
    %v143 = vld [vmem:[%s3 + $0x3e0] sm:$0xff]
    %v144 = vld [vmem:[%s3 + $0x3e8] sm:$0xff]
    %v145 = vld [vmem:[%s3 + $0x3f0] sm:$0xff]
    %v146 = vld [vmem:[%s3 + $0x3f8] sm:$0xff]
    %v147 = vld [vmem:[%s3 + $0x400] sm:$0xff]
    %v148 = vld [vmem:[%s3 + $0x408] sm:$0xff]
    %v149 = vld [vmem:[%s3 + $0x410] sm:$0xff]
    %v150 = vld [vmem:[%s3 + $0x418] sm:$0xff]
    %v151 = vld [vmem:[%s3 + $0x420] sm:$0xff]
    %v152 = vld [vmem:[%s3 + $0x428] sm:$0xff]
    %v153 = vld [vmem:[%s3 + $0x430] sm:$0xff]
    %v154 = vld [vmem:[%s3 + $0x438] sm:$0xff]
    %v155 = vld [vmem:[%s3 + $0x440] sm:$0xff]
    %v156 = vld [vmem:[%s3 + $0x448] sm:$0xff]
    %v157 = vld [vmem:[%s3 + $0x450] sm:$0xff]
    %v158 = vld [vmem:[%s3 + $0x458] sm:$0xff]
    %v159 = vld [vmem:[%s3 + $0x460] sm:$0xff]
    %v160 = vld [vmem:[%s3 + $0x468] sm:$0xff]
    %v161 = vld [vmem:[%s3 + $0x470] sm:$0xff]
    %v162 = vld [vmem:[%s3 + $0x478] sm:$0xff]
    %v163 = vld [vmem:[%s3 + $0x480] sm:$0xff]
    %v164 = vld [vmem:[%s3 + $0x488] sm:$0xff]
    %v165 = vld [vmem:[%s3 + $0x490] sm:$0xff]
    %v166 = vld [vmem:[%s3 + $0x498] sm:$0xff]
    %v167 = vld [vmem:[%s3 + $0x4a0] sm:$0xff]
    %v168 = vld [vmem:[%s3 + $0x4a8] sm:$0xff]
    %v169 = vld [vmem:[%s3 + $0x4b0] sm:$0xff]
    %v170 = vld [vmem:[%s3 + $0x4b8] sm:$0xff]
    %v171 = vld [vmem:[%s3 + $0x4c0] sm:$0xff]
    %v172 = vld [vmem:[%s3 + $0x4c8] sm:$0xff]
    %v173 = vld [vmem:[%s3 + $0x4d0] sm:$0xff]
    %v174 = vld [vmem:[%s3 + $0x4d8] sm:$0xff]
    %v175 = vld [vmem:[%s3 + $0x4e0] sm:$0xff]
    %v176 = vld [vmem:[%s3 + $0x4e8] sm:$0xff]
    %v177 = vld [vmem:[%s3 + $0x4f0] sm:$0xff]
    %v178 = vld [vmem:[%s3 + $0x4f8] sm:$0xff]
    %v179 = vld [vmem:[%s3 + $0x500] sm:$0x1]
    %v180 = vld [vmem:[%s0] sm:$0xff]
    %v181 = vld [vmem:[%s0 + $0x8] sm:$0xff]
    %v182 = vld [vmem:[%s0 + $0x10] sm:$0xff]
    %v183 = vld [vmem:[%s0 + $0x18] sm:$0xff]
    %v184 = vpack.c.bf16 %v181, %v180
    %v185 = vpack.c.bf16 %v183, %v182
    %v186 = vld [vmem:[%s1] sm:$0xf]
    %v187 = vld [vmem:[%s1 + $0x4] sm:$0xf]
    %v188 = vld [vmem:[%s1 + $0x8] sm:$0xf]
    %v189 = vld [vmem:[%s1 + $0xc] sm:$0xf]
    %v190 = vld [vmem:[%s1 + $0x10] sm:$0xf]
    %v191 = vld [vmem:[%s1 + $0x14] sm:$0xf]
    %v192 = vld [vmem:[%s1 + $0x18] sm:$0xf]
    %v193 = vld [vmem:[%s1 + $0x1c] sm:$0xf]
    %v194 = vld [vmem:[%s1 + $0x20] sm:$0xf]
    %v195 = vld [vmem:[%s1 + $0x24] sm:$0xf]
    %v196 = vld [vmem:[%s1 + $0x28] sm:$0xf]
    %v197 = vld [vmem:[%s1 + $0x2c] sm:$0xf]
    %v198 = vld [vmem:[%s1 + $0x30] sm:$0xf]
    %v199 = vld [vmem:[%s1 + $0x34] sm:$0xf]
    %v200 = vld [vmem:[%s1 + $0x38] sm:$0xf]
    %v201 = vld [vmem:[%s1 + $0x3c] sm:$0xf]
    %v202 = vld [vmem:[%s1 + $0x40] sm:$0xf]
    %v203 = vld [vmem:[%s1 + $0x44] sm:$0xf]
    %v204 = vld [vmem:[%s1 + $0x48] sm:$0xf]
    %v205 = vld [vmem:[%s1 + $0x4c] sm:$0xf]
    %v206 = vld [vmem:[%s1 + $0x50] sm:$0xf]
    %v207 = vld [vmem:[%s1 + $0x54] sm:$0xf]
    %v208 = vld [vmem:[%s1 + $0x58] sm:$0xf]
    %v209 = vld [vmem:[%s1 + $0x5c] sm:$0xf]
    %v210 = vld [vmem:[%s1 + $0x60] sm:$0xf]
    %v211 = vld [vmem:[%s1 + $0x64] sm:$0xf]
    %v212 = vld [vmem:[%s1 + $0x68] sm:$0xf]
    %v213 = vld [vmem:[%s1 + $0x6c] sm:$0xf]
    %v214 = vld [vmem:[%s1 + $0x70] sm:$0xf]
    %v215 = vld [vmem:[%s1 + $0x74] sm:$0xf]
    %v216 = vld [vmem:[%s1 + $0x78] sm:$0xf]
    %v217 = vld [vmem:[%s1 + $0x7c] sm:$0xf]
    %v218 = vld [vmem:[%s1 + $0x80] sm:$0xf]
    %v219 = vld [vmem:[%s1 + $0x84] sm:$0xf]
    %v220 = vld [vmem:[%s1 + $0x88] sm:$0xf]
    %v221 = vld [vmem:[%s1 + $0x8c] sm:$0xf]
    %v222 = vld [vmem:[%s1 + $0x90] sm:$0xf]
    %v223 = vld [vmem:[%s1 + $0x94] sm:$0xf]
    %v224 = vld [vmem:[%s1 + $0x98] sm:$0xf]
    %v225 = vld [vmem:[%s1 + $0x9c] sm:$0xf]
    %v226 = vld [vmem:[%s1 + $0xa0] sm:$0xf]
    %v227 = vld [vmem:[%s1 + $0xa4] sm:$0xf]
    %v228 = vld [vmem:[%s1 + $0xa8] sm:$0xf]
    %v229 = vld [vmem:[%s1 + $0xac] sm:$0xf]
    %v230 = vld [vmem:[%s1 + $0xb0] sm:$0xf]
    %v231 = vld [vmem:[%s1 + $0xb4] sm:$0xf]
    %v232 = vld [vmem:[%s1 + $0xb8] sm:$0xf]
    %v233 = vld [vmem:[%s1 + $0xbc] sm:$0xf]
    %v234 = vld [vmem:[%s1 + $0xc0] sm:$0xf]
    %v235 = vld [vmem:[%s1 + $0xc4] sm:$0xf]
    %v236 = vld [vmem:[%s1 + $0xc8] sm:$0xf]
    %v237 = vld [vmem:[%s1 + $0xcc] sm:$0xf]
    %v238 = vld [vmem:[%s1 + $0xd0] sm:$0xf]
    %v239 = vld [vmem:[%s1 + $0xd4] sm:$0xf]
    %v240 = vld [vmem:[%s1 + $0xd8] sm:$0xf]
    %v241 = vld [vmem:[%s1 + $0xdc] sm:$0xf]
    %v242 = vld [vmem:[%s1 + $0xe0] sm:$0xf]
    %v243 = vld [vmem:[%s1 + $0xe4] sm:$0xf]
    %v244 = vld [vmem:[%s1 + $0xe8] sm:$0xf]
    %v245 = vld [vmem:[%s1 + $0xec] sm:$0xf]
    %v246 = vld [vmem:[%s1 + $0xf0] sm:$0xf]
    %v247 = vld [vmem:[%s1 + $0xf4] sm:$0xf]
    %v248 = vld [vmem:[%s1 + $0xf8] sm:$0xf]
    %v249 = vld [vmem:[%s1 + $0xfc] sm:$0xf]
    %251 = vset.pattern.permute.xlu0 0
    %252 = vperm.xlu0 %251, %v19
    %v253 = vpop.permute.xlu0 %252
    %256 = vset.pattern.permute.xlu0 0
    %257 = vperm.xlu0 %256, %v20
    %v258 = vpop.permute.xlu0 %257
    %261 = vset.pattern.permute.xlu0 0
    %262 = vperm.xlu0 %261, %v21
    %v263 = vpop.permute.xlu0 %262
    %266 = vset.pattern.permute.xlu0 0
    %267 = vperm.xlu0 %266, %v22
    %v268 = vpop.permute.xlu0 %267
    %271 = vset.pattern.permute.xlu0 0
    %272 = vperm.xlu0 %271, %v23
    %v273 = vpop.permute.xlu0 %272
    %276 = vset.pattern.permute.xlu0 0
    %277 = vperm.xlu0 %276, %v24
    %v278 = vpop.permute.xlu0 %277
    %281 = vset.pattern.permute.xlu0 0
    %282 = vperm.xlu0 %281, %v25
    %v283 = vpop.permute.xlu0 %282
    %286 = vset.pattern.permute.xlu0 0
    %287 = vperm.xlu0 %286, %v26
    %v288 = vpop.permute.xlu0 %287
    %291 = vset.pattern.permute.xlu0 0
    %292 = vperm.xlu0 %291, %v27
    %v293 = vpop.permute.xlu0 %292
    %296 = vset.pattern.permute.xlu0 0
    %297 = vperm.xlu0 %296, %v28
    %v298 = vpop.permute.xlu0 %297
    %301 = vset.pattern.permute.xlu0 0
    %302 = vperm.xlu0 %301, %v29
    %v303 = vpop.permute.xlu0 %302
    %306 = vset.pattern.permute.xlu0 0
    %307 = vperm.xlu0 %306, %v30
    %v308 = vpop.permute.xlu0 %307
    %311 = vset.pattern.permute.xlu0 0
    %312 = vperm.xlu0 %311, %v31
    %v313 = vpop.permute.xlu0 %312
    %316 = vset.pattern.permute.xlu0 0
    %317 = vperm.xlu0 %316, %v32
    %v318 = vpop.permute.xlu0 %317
    %321 = vset.pattern.permute.xlu0 0
    %322 = vperm.xlu0 %321, %v33
    %v323 = vpop.permute.xlu0 %322
    %326 = vset.pattern.permute.xlu0 0
    %327 = vperm.xlu0 %326, %v34
    %v328 = vpop.permute.xlu0 %327
    %331 = vset.pattern.permute.xlu0 0
    %332 = vperm.xlu0 %331, %v35
    %v333 = vpop.permute.xlu0 %332
    %336 = vset.pattern.permute.xlu0 0
    %337 = vperm.xlu0 %336, %v36
    %v338 = vpop.permute.xlu0 %337
    %341 = vset.pattern.permute.xlu0 0
    %342 = vperm.xlu0 %341, %v37
    %v343 = vpop.permute.xlu0 %342
    %346 = vset.pattern.permute.xlu0 0
    %347 = vperm.xlu0 %346, %v38
    %v348 = vpop.permute.xlu0 %347
    %351 = vset.pattern.permute.xlu0 0
    %352 = vperm.xlu0 %351, %v39
    %v353 = vpop.permute.xlu0 %352
    %356 = vset.pattern.permute.xlu0 0
    %357 = vperm.xlu0 %356, %v40
    %v358 = vpop.permute.xlu0 %357
    %361 = vset.pattern.permute.xlu0 0
    %362 = vperm.xlu0 %361, %v41
    %v363 = vpop.permute.xlu0 %362
    %366 = vset.pattern.permute.xlu0 0
    %367 = vperm.xlu0 %366, %v42
    %v368 = vpop.permute.xlu0 %367
    %371 = vset.pattern.permute.xlu0 0
    %372 = vperm.xlu0 %371, %v43
    %v373 = vpop.permute.xlu0 %372
    %376 = vset.pattern.permute.xlu0 0
    %377 = vperm.xlu0 %376, %v44
    %v378 = vpop.permute.xlu0 %377
    %381 = vset.pattern.permute.xlu0 0
    %382 = vperm.xlu0 %381, %v45
    %v383 = vpop.permute.xlu0 %382
    %386 = vset.pattern.permute.xlu0 0
    %387 = vperm.xlu0 %386, %v46
    %v388 = vpop.permute.xlu0 %387
    %391 = vset.pattern.permute.xlu0 0
    %392 = vperm.xlu0 %391, %v47
    %v393 = vpop.permute.xlu0 %392
    %396 = vset.pattern.permute.xlu0 0
    %397 = vperm.xlu0 %396, %v48
    %v398 = vpop.permute.xlu0 %397
    %401 = vset.pattern.permute.xlu0 0
    %402 = vperm.xlu0 %401, %v49
    %v403 = vpop.permute.xlu0 %402
    %406 = vset.pattern.permute.xlu0 0
    %407 = vperm.xlu0 %406, %v50
    %v408 = vpop.permute.xlu0 %407
    %411 = vset.pattern.permute.xlu0 0
    %412 = vperm.xlu0 %411, %v51
    %v413 = vpop.permute.xlu0 %412
    %416 = vset.pattern.permute.xlu0 0
    %417 = vperm.xlu0 %416, %v52
    %v418 = vpop.permute.xlu0 %417
    %421 = vset.pattern.permute.xlu0 0
    %422 = vperm.xlu0 %421, %v53
    %v423 = vpop.permute.xlu0 %422
    %426 = vset.pattern.permute.xlu0 0
    %427 = vperm.xlu0 %426, %v54
    %v428 = vpop.permute.xlu0 %427
    %431 = vset.pattern.permute.xlu0 0
    %432 = vperm.xlu0 %431, %v55
    %v433 = vpop.permute.xlu0 %432
    %436 = vset.pattern.permute.xlu0 0
    %437 = vperm.xlu0 %436, %v56
    %v438 = vpop.permute.xlu0 %437
    %441 = vset.pattern.permute.xlu0 0
    %442 = vperm.xlu0 %441, %v57
    %v443 = vpop.permute.xlu0 %442
    %446 = vset.pattern.permute.xlu0 0
    %447 = vperm.xlu0 %446, %v58
    %v448 = vpop.permute.xlu0 %447
    %451 = vset.pattern.permute.xlu0 0
    %452 = vperm.xlu0 %451, %v59
    %v453 = vpop.permute.xlu0 %452
    %456 = vset.pattern.permute.xlu0 0
    %457 = vperm.xlu0 %456, %v60
    %v458 = vpop.permute.xlu0 %457
    %461 = vset.pattern.permute.xlu0 0
    %462 = vperm.xlu0 %461, %v61
    %v463 = vpop.permute.xlu0 %462
    %466 = vset.pattern.permute.xlu0 0
    %467 = vperm.xlu0 %466, %v62
    %v468 = vpop.permute.xlu0 %467
    %471 = vset.pattern.permute.xlu0 0
    %472 = vperm.xlu0 %471, %v63
    %v473 = vpop.permute.xlu0 %472
    %476 = vset.pattern.permute.xlu0 0
    %477 = vperm.xlu0 %476, %v64
    %v478 = vpop.permute.xlu0 %477
    %481 = vset.pattern.permute.xlu0 0
    %482 = vperm.xlu0 %481, %v65
    %v483 = vpop.permute.xlu0 %482
    %486 = vset.pattern.permute.xlu0 0
    %487 = vperm.xlu0 %486, %v66
    %v488 = vpop.permute.xlu0 %487
    %491 = vset.pattern.permute.xlu0 0
    %492 = vperm.xlu0 %491, %v67
    %v493 = vpop.permute.xlu0 %492
    %496 = vset.pattern.permute.xlu0 0
    %497 = vperm.xlu0 %496, %v68
    %v498 = vpop.permute.xlu0 %497
    %501 = vset.pattern.permute.xlu0 0
    %502 = vperm.xlu0 %501, %v69
    %v503 = vpop.permute.xlu0 %502
    %506 = vset.pattern.permute.xlu0 0
    %507 = vperm.xlu0 %506, %v70
    %v508 = vpop.permute.xlu0 %507
    %511 = vset.pattern.permute.xlu0 0
    %512 = vperm.xlu0 %511, %v71
    %v513 = vpop.permute.xlu0 %512
    %516 = vset.pattern.permute.xlu0 0
    %517 = vperm.xlu0 %516, %v72
    %v518 = vpop.permute.xlu0 %517
    %521 = vset.pattern.permute.xlu0 0
    %522 = vperm.xlu0 %521, %v73
    %v523 = vpop.permute.xlu0 %522
    %526 = vset.pattern.permute.xlu0 0
    %527 = vperm.xlu0 %526, %v74
    %v528 = vpop.permute.xlu0 %527
    %531 = vset.pattern.permute.xlu0 0
    %532 = vperm.xlu0 %531, %v75
    %v533 = vpop.permute.xlu0 %532
    %536 = vset.pattern.permute.xlu0 0
    %537 = vperm.xlu0 %536, %v76
    %v538 = vpop.permute.xlu0 %537
    %541 = vset.pattern.permute.xlu0 0
    %542 = vperm.xlu0 %541, %v77
    %v543 = vpop.permute.xlu0 %542
    %546 = vset.pattern.permute.xlu0 0
    %547 = vperm.xlu0 %546, %v78
    %v548 = vpop.permute.xlu0 %547
    %551 = vset.pattern.permute.xlu0 0
    %552 = vperm.xlu0 %551, %v79
    %v553 = vpop.permute.xlu0 %552
    %556 = vset.pattern.permute.xlu0 0
    %557 = vperm.xlu0 %556, %v80
    %v558 = vpop.permute.xlu0 %557
    %561 = vset.pattern.permute.xlu0 0
    %562 = vperm.xlu0 %561, %v81
    %v563 = vpop.permute.xlu0 %562
    %566 = vset.pattern.permute.xlu0 0
    %567 = vperm.xlu0 %566, %v82
    %v568 = vpop.permute.xlu0 %567
    %v634 = vunpack.c.l.b16 %v186
    %v635 = vunpack.c.l.b16 %v187
    %v636 = vunpack.c.l.b16 %v188
    %v637 = vunpack.c.l.b16 %v189
    %v638 = vunpack.c.l.b16 %v190
    %v639 = vunpack.c.l.b16 %v191
    %v640 = vunpack.c.l.b16 %v192
    %v641 = vunpack.c.l.b16 %v193
    %v642 = vunpack.c.l.b16 %v194
    %v643 = vunpack.c.l.b16 %v195
    %v644 = vunpack.c.l.b16 %v196
    %v645 = vunpack.c.l.b16 %v197
    %v646 = vunpack.c.l.b16 %v198
    %v647 = vunpack.c.l.b16 %v199
    %v648 = vunpack.c.l.b16 %v200
    %v649 = vunpack.c.l.b16 %v201
    %v650 = vunpack.c.l.b16 %v202
    %v651 = vunpack.c.l.b16 %v203
    %v652 = vunpack.c.l.b16 %v204
    %v653 = vunpack.c.l.b16 %v205
    %v654 = vunpack.c.l.b16 %v206
    %v655 = vunpack.c.l.b16 %v207
    %v656 = vunpack.c.l.b16 %v208
    %v657 = vunpack.c.l.b16 %v209
    %v658 = vunpack.c.l.b16 %v210
    %v659 = vunpack.c.l.b16 %v211
    %v660 = vunpack.c.l.b16 %v212
    %v661 = vunpack.c.l.b16 %v213
    %v662 = vunpack.c.l.b16 %v214
    %v663 = vunpack.c.l.b16 %v215
    %v664 = vunpack.c.l.b16 %v216
    %v665 = vunpack.c.l.b16 %v217
    %v666 = vunpack.c.l.b16 %v218
    %v667 = vunpack.c.l.b16 %v219
    %v668 = vunpack.c.l.b16 %v220
    %v669 = vunpack.c.l.b16 %v221
    %v670 = vunpack.c.l.b16 %v222
    %v671 = vunpack.c.l.b16 %v223
    %v672 = vunpack.c.l.b16 %v224
    %v673 = vunpack.c.l.b16 %v225
    %v674 = vunpack.c.l.b16 %v226
    %v675 = vunpack.c.l.b16 %v227
    %v676 = vunpack.c.l.b16 %v228
    %v677 = vunpack.c.l.b16 %v229
    %v678 = vunpack.c.l.b16 %v230
    %v679 = vunpack.c.l.b16 %v231
    %v680 = vunpack.c.l.b16 %v232
    %v681 = vunpack.c.l.b16 %v233
    %v682 = vunpack.c.l.b16 %v234
    %v683 = vunpack.c.l.b16 %v235
    %v684 = vunpack.c.l.b16 %v236
    %v685 = vunpack.c.l.b16 %v237
    %v686 = vunpack.c.l.b16 %v238
    %v687 = vunpack.c.l.b16 %v239
    %v688 = vunpack.c.l.b16 %v240
    %v689 = vunpack.c.l.b16 %v241
    %v690 = vunpack.c.l.b16 %v242
    %v691 = vunpack.c.l.b16 %v243
    %v692 = vunpack.c.l.b16 %v244
    %v693 = vunpack.c.l.b16 %v245
    %v694 = vunpack.c.l.b16 %v246
    %v695 = vunpack.c.l.b16 %v247
    %v696 = vunpack.c.l.b16 %v248
    %v697 = vunpack.c.l.b16 %v249
    %v698 = vpack.c.b16 %v635, %v634
    %v699 = vpack.c.b16 %v637, %v636
    %v700 = vpack.c.b16 %v639, %v638
    %v701 = vpack.c.b16 %v641, %v640
    %v702 = vpack.c.b16 %v643, %v642
    %v703 = vpack.c.b16 %v645, %v644
    %v704 = vpack.c.b16 %v647, %v646
    %v705 = vpack.c.b16 %v649, %v648
    %v706 = vpack.c.b16 %v651, %v650
    %v707 = vpack.c.b16 %v653, %v652
    %v708 = vpack.c.b16 %v655, %v654
    %v709 = vpack.c.b16 %v657, %v656
    %v710 = vpack.c.b16 %v659, %v658
    %v711 = vpack.c.b16 %v661, %v660
    %v712 = vpack.c.b16 %v663, %v662
    %v713 = vpack.c.b16 %v665, %v664
    %v714 = vpack.c.b16 %v667, %v666
    %v715 = vpack.c.b16 %v669, %v668
    %v716 = vpack.c.b16 %v671, %v670
    %v717 = vpack.c.b16 %v673, %v672
    %v718 = vpack.c.b16 %v675, %v674
    %v719 = vpack.c.b16 %v677, %v676
    %v720 = vpack.c.b16 %v679, %v678
    %v721 = vpack.c.b16 %v681, %v680
    %v722 = vpack.c.b16 %v683, %v682
    %v723 = vpack.c.b16 %v685, %v684
    %v724 = vpack.c.b16 %v687, %v686
    %v725 = vpack.c.b16 %v689, %v688
    %v726 = vpack.c.b16 %v691, %v690
    %v727 = vpack.c.b16 %v693, %v692
    %v728 = vpack.c.b16 %v695, %v694
    %v729 = vpack.c.b16 %v697, %v696
    %vm730 = vcmask 261120
    %v732 = vsel %vm730, %v698, 0
    %v735 = vsel %vm730, %v699, 0
    %v738 = vsel %vm730, %v700, 0
    %v741 = vsel %vm730, %v701, 0
    %v744 = vsel %vm730, %v702, 0
    %v747 = vsel %vm730, %v703, 0
    %v750 = vsel %vm730, %v704, 0
    %v753 = vsel %vm730, %v705, 0
    %v756 = vsel %vm730, %v706, 0
    %v759 = vsel %vm730, %v707, 0
    %v762 = vsel %vm730, %v708, 0
    %v765 = vsel %vm730, %v709, 0
    %v768 = vsel %vm730, %v710, 0
    %v771 = vsel %vm730, %v711, 0
    %v774 = vsel %vm730, %v712, 0
    %v777 = vsel %vm730, %v713, 0
    %v780 = vsel %vm730, %v714, 0
    %v783 = vsel %vm730, %v715, 0
    %v786 = vsel %vm730, %v716, 0
    %v789 = vsel %vm730, %v717, 0
    %v792 = vsel %vm730, %v718, 0
    %v795 = vsel %vm730, %v719, 0
    %v798 = vsel %vm730, %v720, 0
    %v801 = vsel %vm730, %v721, 0
    %v804 = vsel %vm730, %v722, 0
    %v807 = vsel %vm730, %v723, 0
    %v810 = vsel %vm730, %v724, 0
    %v813 = vsel %vm730, %v725, 0
    %v816 = vsel %vm730, %v726, 0
    %v819 = vsel %vm730, %v727, 0
    %v822 = vsel %vm730, %v728, 0
    %v825 = vsel %vm730, %v729, 0
    %827 = vmatprep.subr.bf16.mxu0 0
    %828 = vmatpush1.bf16.msra.mxu0 0
    %829 = vmatprep.subr.bf16.mxu0 0
    %830 = vmatpush1.bf16.msra.mxu0 0
    %831 = vmatprep.subr.bf16.mxu0 0
    %832 = vmatpush1.bf16.msra.mxu0 0
    %833 = vmatprep.subr.bf16.mxu0 0
    %834 = vmatpush1.bf16.msra.mxu0 0
    %835 = vmatprep.subr.bf16.mxu0 0
    %836 = vmatpush1.bf16.msra.mxu0 0
    %837 = vmatprep.subr.bf16.mxu0 0
    %838 = vmatpush1.bf16.msra.mxu0 0
    %839 = vmatprep.subr.bf16.mxu0 0
    %840 = vmatpush1.bf16.msra.mxu0 %v185
    %841 = vmatprep.subr.bf16.mxu0 0
    %842 = vmatpush1.bf16.msra.mxu0 %v184
    %843 = vmatprep.subr.bf16.mxu0 0
    %844 = vmatpush2.bf16.msra.mxu0 0
    %845 = vmatprep.subr.bf16.mxu0 0
    %846 = vmatpush2.bf16.msra.mxu0 0
    %847 = vmatprep.subr.bf16.mxu0 0
    %848 = vmatpush2.bf16.msra.mxu0 0
    %849 = vmatprep.subr.bf16.mxu0 0
    %850 = vmatpush2.bf16.msra.mxu0 0
    %851 = vmatprep.subr.bf16.mxu0 0
    %852 = vmatpush2.bf16.msra.mxu0 0
    %853 = vmatprep.subr.bf16.mxu0 0
    %854 = vmatpush2.bf16.msra.mxu0 0
    %855 = vmatprep.subr.bf16.mxu0 0
    %856 = vmatpush2.bf16.msra.mxu0 0
    %857 = vmatprep.subr.bf16.mxu0 0
    %858 = vmatpush2.bf16.msra.mxu0 0
    %859 = vmatprep.mubr.bf16.mxu0 0
    %860 = vmatmul.mubr.bf16.gmra.mxu0 %v732
    %v861 = vpop.f32.mrf.mxu0
    %v862 = vadd.f32 %v253, %v861
    %v863 = vpop.f32.mrf.mxu0
    %v864 = vpop.f32.mrf.mxu0
    %v865 = vadd.f32 %v258, %v864
    %v866 = vpop.f32.mrf.mxu0
    %867 = vmatprep.mubr.bf16.mxu0 0
    %868 = vmatmul.mubr.bf16.gmra.mxu0 %v735
    %v869 = vpop.f32.mrf.mxu0
    %v870 = vadd.f32 %v263, %v869
    %v871 = vpop.f32.mrf.mxu0
    %v872 = vpop.f32.mrf.mxu0
    %v873 = vadd.f32 %v268, %v872
    %v874 = vpop.f32.mrf.mxu0
    %875 = vmatprep.mubr.bf16.mxu0 0
    %876 = vmatmul.mubr.bf16.gmra.mxu0 %v738
    %v877 = vpop.f32.mrf.mxu0
    %v878 = vadd.f32 %v273, %v877
    %v879 = vpop.f32.mrf.mxu0
    %v880 = vpop.f32.mrf.mxu0
    %v881 = vadd.f32 %v278, %v880
    %v882 = vpop.f32.mrf.mxu0
    %883 = vmatprep.mubr.bf16.mxu0 0
    %884 = vmatmul.mubr.bf16.gmra.mxu0 %v741
    %v885 = vpop.f32.mrf.mxu0
    %v886 = vadd.f32 %v283, %v885
    %v887 = vpop.f32.mrf.mxu0
    %v888 = vpop.f32.mrf.mxu0
    %v889 = vadd.f32 %v288, %v888
    %v890 = vpop.f32.mrf.mxu0
    %891 = vmatprep.mubr.bf16.mxu0 0
    %892 = vmatmul.mubr.bf16.gmra.mxu0 %v744
    %v893 = vpop.f32.mrf.mxu0
    %v894 = vadd.f32 %v293, %v893
    %v895 = vpop.f32.mrf.mxu0
    %v896 = vpop.f32.mrf.mxu0
    %v897 = vadd.f32 %v298, %v896
    %v898 = vpop.f32.mrf.mxu0
    %899 = vmatprep.mubr.bf16.mxu0 0
    %900 = vmatmul.mubr.bf16.gmra.mxu0 %v747
    %v901 = vpop.f32.mrf.mxu0
    %v902 = vadd.f32 %v303, %v901
    %v903 = vpop.f32.mrf.mxu0
    %v904 = vpop.f32.mrf.mxu0
    %v905 = vadd.f32 %v308, %v904
    %v906 = vpop.f32.mrf.mxu0
    %907 = vmatprep.mubr.bf16.mxu0 0
    %908 = vmatmul.mubr.bf16.gmra.mxu0 %v750
    %v909 = vpop.f32.mrf.mxu0
    %v910 = vadd.f32 %v313, %v909
    %v911 = vpop.f32.mrf.mxu0
    %v912 = vpop.f32.mrf.mxu0
    %v913 = vadd.f32 %v318, %v912
    %v914 = vpop.f32.mrf.mxu0
    %915 = vmatprep.mubr.bf16.mxu0 0
    %916 = vmatmul.mubr.bf16.gmra.mxu0 %v753
    %v917 = vpop.f32.mrf.mxu0
    %v918 = vadd.f32 %v323, %v917
    %v919 = vpop.f32.mrf.mxu0
    %v920 = vpop.f32.mrf.mxu0
    %v921 = vadd.f32 %v328, %v920
    %v922 = vpop.f32.mrf.mxu0
    %923 = vmatprep.mubr.bf16.mxu0 0
    %924 = vmatmul.mubr.bf16.gmra.mxu0 %v756
    %v925 = vpop.f32.mrf.mxu0
    %v926 = vadd.f32 %v333, %v925
    %v927 = vpop.f32.mrf.mxu0
    %v928 = vpop.f32.mrf.mxu0
    %v929 = vadd.f32 %v338, %v928
    %v930 = vpop.f32.mrf.mxu0
    %931 = vmatprep.mubr.bf16.mxu0 0
    %932 = vmatmul.mubr.bf16.gmra.mxu0 %v759
    %v933 = vpop.f32.mrf.mxu0
    %v934 = vadd.f32 %v343, %v933
    %v935 = vpop.f32.mrf.mxu0
    %v936 = vpop.f32.mrf.mxu0
    %v937 = vadd.f32 %v348, %v936
    %v938 = vpop.f32.mrf.mxu0
    %939 = vmatprep.mubr.bf16.mxu0 0
    %940 = vmatmul.mubr.bf16.gmra.mxu0 %v762
    %v941 = vpop.f32.mrf.mxu0
    %v942 = vadd.f32 %v353, %v941
    %v943 = vpop.f32.mrf.mxu0
    %v944 = vpop.f32.mrf.mxu0
    %v945 = vadd.f32 %v358, %v944
    %v946 = vpop.f32.mrf.mxu0
    %947 = vmatprep.mubr.bf16.mxu0 0
    %948 = vmatmul.mubr.bf16.gmra.mxu0 %v765
    %v949 = vpop.f32.mrf.mxu0
    %v950 = vadd.f32 %v363, %v949
    %v951 = vpop.f32.mrf.mxu0
    %v952 = vpop.f32.mrf.mxu0
    %v953 = vadd.f32 %v368, %v952
    %v954 = vpop.f32.mrf.mxu0
    %955 = vmatprep.mubr.bf16.mxu0 0
    %956 = vmatmul.mubr.bf16.gmra.mxu0 %v768
    %v957 = vpop.f32.mrf.mxu0
    %v958 = vadd.f32 %v373, %v957
    %v959 = vpop.f32.mrf.mxu0
    %v960 = vpop.f32.mrf.mxu0
    %v961 = vadd.f32 %v378, %v960
    %v962 = vpop.f32.mrf.mxu0
    %963 = vmatprep.mubr.bf16.mxu0 0
    %964 = vmatmul.mubr.bf16.gmra.mxu0 %v771
    %v965 = vpop.f32.mrf.mxu0
    %v966 = vadd.f32 %v383, %v965
    %v967 = vpop.f32.mrf.mxu0
    %v968 = vpop.f32.mrf.mxu0
    %v969 = vadd.f32 %v388, %v968
    %v970 = vpop.f32.mrf.mxu0
    %971 = vmatprep.mubr.bf16.mxu0 0
    %972 = vmatmul.mubr.bf16.gmra.mxu0 %v774
    %v973 = vpop.f32.mrf.mxu0
    %v974 = vadd.f32 %v393, %v973
    %v975 = vpop.f32.mrf.mxu0
    %v976 = vpop.f32.mrf.mxu0
    %v977 = vadd.f32 %v398, %v976
    %v978 = vpop.f32.mrf.mxu0
    %979 = vmatprep.mubr.bf16.mxu0 0
    %980 = vmatmul.mubr.bf16.gmra.mxu0 %v777
    %v981 = vpop.f32.mrf.mxu0
    %v982 = vadd.f32 %v403, %v981
    %v983 = vpop.f32.mrf.mxu0
    %v984 = vpop.f32.mrf.mxu0
    %v985 = vadd.f32 %v408, %v984
    %v986 = vpop.f32.mrf.mxu0
    %987 = vmatprep.mubr.bf16.mxu0 0
    %988 = vmatmul.mubr.bf16.gmra.mxu0 %v780
    %v989 = vpop.f32.mrf.mxu0
    %v990 = vadd.f32 %v413, %v989
    %v991 = vpop.f32.mrf.mxu0
    %v992 = vpop.f32.mrf.mxu0
    %v993 = vadd.f32 %v418, %v992
    %v994 = vpop.f32.mrf.mxu0
    %995 = vmatprep.mubr.bf16.mxu0 0
    %996 = vmatmul.mubr.bf16.gmra.mxu0 %v783
    %v997 = vpop.f32.mrf.mxu0
    %v998 = vadd.f32 %v423, %v997
    %v999 = vpop.f32.mrf.mxu0
    %v1000 = vpop.f32.mrf.mxu0
    %v1001 = vadd.f32 %v428, %v1000
    %v1002 = vpop.f32.mrf.mxu0
    %1003 = vmatprep.mubr.bf16.mxu0 0
    %1004 = vmatmul.mubr.bf16.gmra.mxu0 %v786
    %v1005 = vpop.f32.mrf.mxu0
    %v1006 = vadd.f32 %v433, %v1005
    %v1007 = vpop.f32.mrf.mxu0
    %v1008 = vpop.f32.mrf.mxu0
    %v1009 = vadd.f32 %v438, %v1008
    %v1010 = vpop.f32.mrf.mxu0
    %1011 = vmatprep.mubr.bf16.mxu0 0
    %1012 = vmatmul.mubr.bf16.gmra.mxu0 %v789
    %v1013 = vpop.f32.mrf.mxu0
    %v1014 = vadd.f32 %v443, %v1013
    %v1015 = vpop.f32.mrf.mxu0
    %v1016 = vpop.f32.mrf.mxu0
    %v1017 = vadd.f32 %v448, %v1016
    %v1018 = vpop.f32.mrf.mxu0
    %1019 = vmatprep.mubr.bf16.mxu0 0
    %1020 = vmatmul.mubr.bf16.gmra.mxu0 %v792
    %v1021 = vpop.f32.mrf.mxu0
    %v1022 = vadd.f32 %v453, %v1021
    %v1023 = vpop.f32.mrf.mxu0
    %v1024 = vpop.f32.mrf.mxu0
    %v1025 = vadd.f32 %v458, %v1024
    %v1026 = vpop.f32.mrf.mxu0
    %1027 = vmatprep.mubr.bf16.mxu0 0
    %1028 = vmatmul.mubr.bf16.gmra.mxu0 %v795
    %v1029 = vpop.f32.mrf.mxu0
    %v1030 = vadd.f32 %v463, %v1029
    %v1031 = vpop.f32.mrf.mxu0
    %v1032 = vpop.f32.mrf.mxu0
    %v1033 = vadd.f32 %v468, %v1032
    %v1034 = vpop.f32.mrf.mxu0
    %1035 = vmatprep.mubr.bf16.mxu0 0
    %1036 = vmatmul.mubr.bf16.gmra.mxu0 %v798
    %v1037 = vpop.f32.mrf.mxu0
    %v1038 = vadd.f32 %v473, %v1037
    %v1039 = vpop.f32.mrf.mxu0
    %v1040 = vpop.f32.mrf.mxu0
    %v1041 = vadd.f32 %v478, %v1040
    %v1042 = vpop.f32.mrf.mxu0
    %1043 = vmatprep.mubr.bf16.mxu0 0
    %1044 = vmatmul.mubr.bf16.gmra.mxu0 %v801
    %v1045 = vpop.f32.mrf.mxu0
    %v1046 = vadd.f32 %v483, %v1045
    %v1047 = vpop.f32.mrf.mxu0
    %v1048 = vpop.f32.mrf.mxu0
    %v1049 = vadd.f32 %v488, %v1048
    %v1050 = vpop.f32.mrf.mxu0
    %1051 = vmatprep.mubr.bf16.mxu0 0
    %1052 = vmatmul.mubr.bf16.gmra.mxu0 %v804
    %v1053 = vpop.f32.mrf.mxu0
    %v1054 = vadd.f32 %v493, %v1053
    %v1055 = vpop.f32.mrf.mxu0
    %v1056 = vpop.f32.mrf.mxu0
    %v1057 = vadd.f32 %v498, %v1056
    %v1058 = vpop.f32.mrf.mxu0
    %1059 = vmatprep.mubr.bf16.mxu0 0
    %1060 = vmatmul.mubr.bf16.gmra.mxu0 %v807
    %v1061 = vpop.f32.mrf.mxu0
    %v1062 = vadd.f32 %v503, %v1061
    %v1063 = vpop.f32.mrf.mxu0
    %v1064 = vpop.f32.mrf.mxu0
    %v1065 = vadd.f32 %v508, %v1064
    %v1066 = vpop.f32.mrf.mxu0
    %1067 = vmatprep.mubr.bf16.mxu0 0
    %1068 = vmatmul.mubr.bf16.gmra.mxu0 %v810
    %v1069 = vpop.f32.mrf.mxu0
    %v1070 = vadd.f32 %v513, %v1069
    %v1071 = vpop.f32.mrf.mxu0
    %v1072 = vpop.f32.mrf.mxu0
    %v1073 = vadd.f32 %v518, %v1072
    %v1074 = vpop.f32.mrf.mxu0
    %1075 = vmatprep.mubr.bf16.mxu0 0
    %1076 = vmatmul.mubr.bf16.gmra.mxu0 %v813
    %v1077 = vpop.f32.mrf.mxu0
    %v1078 = vadd.f32 %v523, %v1077
    %v1079 = vpop.f32.mrf.mxu0
    %v1080 = vpop.f32.mrf.mxu0
    %v1081 = vadd.f32 %v528, %v1080
    %v1082 = vpop.f32.mrf.mxu0
    %1083 = vmatprep.mubr.bf16.mxu0 0
    %1084 = vmatmul.mubr.bf16.gmra.mxu0 %v816
    %v1085 = vpop.f32.mrf.mxu0
    %v1086 = vadd.f32 %v533, %v1085
    %v1087 = vpop.f32.mrf.mxu0
    %v1088 = vpop.f32.mrf.mxu0
    %v1089 = vadd.f32 %v538, %v1088
    %v1090 = vpop.f32.mrf.mxu0
    %1091 = vmatprep.mubr.bf16.mxu0 0
    %1092 = vmatmul.mubr.bf16.gmra.mxu0 %v819
    %v1093 = vpop.f32.mrf.mxu0
    %v1094 = vadd.f32 %v543, %v1093
    %v1095 = vpop.f32.mrf.mxu0
    %v1096 = vpop.f32.mrf.mxu0
    %v1097 = vadd.f32 %v548, %v1096
    %v1098 = vpop.f32.mrf.mxu0
    %1099 = vmatprep.mubr.bf16.mxu0 0
    %1100 = vmatmul.mubr.bf16.gmra.mxu0 %v822
    %v1101 = vpop.f32.mrf.mxu0
    %v1102 = vadd.f32 %v553, %v1101
    %v1103 = vpop.f32.mrf.mxu0
    %v1104 = vpop.f32.mrf.mxu0
    %v1105 = vadd.f32 %v558, %v1104
    %v1106 = vpop.f32.mrf.mxu0
    %1107 = vmatprep.mubr.bf16.mxu0 0
    %1108 = vmatmul.mubr.bf16.gmra.mxu0 %v825
    %v1109 = vpop.f32.mrf.mxu0
    %v1110 = vadd.f32 %v563, %v1109
    %v1111 = vpop.f32.mrf.mxu0
    %v1112 = vpop.f32.mrf.mxu0
    %v1113 = vadd.f32 %v568, %v1112
    %v1114 = vpop.f32.mrf.mxu0
    %1115 = vdwg.mxu0
    %v1116 = vmax.f32 %v862, 0.0
    %v1117 = vmax.f32 %v865, 0.0
    %v1118 = vmax.f32 %v870, 0.0
    %v1119 = vmax.f32 %v873, 0.0
    %v1120 = vmax.f32 %v878, 0.0
    %v1121 = vmax.f32 %v881, 0.0
    %v1122 = vmax.f32 %v886, 0.0
    %v1123 = vmax.f32 %v889, 0.0
    %v1124 = vmax.f32 %v894, 0.0
    %v1125 = vmax.f32 %v897, 0.0
    %v1126 = vmax.f32 %v902, 0.0
    %v1127 = vmax.f32 %v905, 0.0
    %v1128 = vmax.f32 %v910, 0.0
    %v1129 = vmax.f32 %v913, 0.0
    %v1130 = vmax.f32 %v918, 0.0
    %v1131 = vmax.f32 %v921, 0.0
    %v1132 = vmax.f32 %v926, 0.0
    %v1133 = vmax.f32 %v929, 0.0
    %v1134 = vmax.f32 %v934, 0.0
    %v1135 = vmax.f32 %v937, 0.0
    %v1136 = vmax.f32 %v942, 0.0
    %v1137 = vmax.f32 %v945, 0.0
    %v1138 = vmax.f32 %v950, 0.0
    %v1139 = vmax.f32 %v953, 0.0
    %v1140 = vmax.f32 %v958, 0.0
    %v1141 = vmax.f32 %v961, 0.0
    %v1142 = vmax.f32 %v966, 0.0
    %v1143 = vmax.f32 %v969, 0.0
    %v1144 = vmax.f32 %v974, 0.0
    %v1145 = vmax.f32 %v977, 0.0
    %v1146 = vmax.f32 %v982, 0.0
    %v1147 = vmax.f32 %v985, 0.0
    %v1148 = vmax.f32 %v990, 0.0
    %v1149 = vmax.f32 %v993, 0.0
    %v1150 = vmax.f32 %v998, 0.0
    %v1151 = vmax.f32 %v1001, 0.0
    %v1152 = vmax.f32 %v1006, 0.0
    %v1153 = vmax.f32 %v1009, 0.0
    %v1154 = vmax.f32 %v1014, 0.0
    %v1155 = vmax.f32 %v1017, 0.0
    %v1156 = vmax.f32 %v1022, 0.0
    %v1157 = vmax.f32 %v1025, 0.0
    %v1158 = vmax.f32 %v1030, 0.0
    %v1159 = vmax.f32 %v1033, 0.0
    %v1160 = vmax.f32 %v1038, 0.0
    %v1161 = vmax.f32 %v1041, 0.0
    %v1162 = vmax.f32 %v1046, 0.0
    %v1163 = vmax.f32 %v1049, 0.0
    %v1164 = vmax.f32 %v1054, 0.0
    %v1165 = vmax.f32 %v1057, 0.0
    %v1166 = vmax.f32 %v1062, 0.0
    %v1167 = vmax.f32 %v1065, 0.0
    %v1168 = vmax.f32 %v1070, 0.0
    %v1169 = vmax.f32 %v1073, 0.0
    %v1170 = vmax.f32 %v1078, 0.0
    %v1171 = vmax.f32 %v1081, 0.0
    %v1172 = vmax.f32 %v1086, 0.0
    %v1173 = vmax.f32 %v1089, 0.0
    %v1174 = vmax.f32 %v1094, 0.0
    %v1175 = vmax.f32 %v1097, 0.0
    %v1176 = vmax.f32 %v1102, 0.0
    %v1177 = vmax.f32 %v1105, 0.0
    %v1178 = vmax.f32 %v1110, 0.0
    %v1179 = vmax.f32 %v1113, 0.0
    %v1180 = vld [vmem:[%s2] sm:$0xff]
    %v1181 = vld [vmem:[%s2 + $0x8] sm:$0xff]
    %v1182 = vld [vmem:[%s2 + $0x10] sm:$0xff]
    %v1183 = vld [vmem:[%s2 + $0x18] sm:$0xff]
    %v1184 = vld [vmem:[%s2 + $0x20] sm:$0xff]
    %v1185 = vld [vmem:[%s2 + $0x28] sm:$0xff]
    %v1186 = vld [vmem:[%s2 + $0x30] sm:$0xff]
    %v1187 = vld [vmem:[%s2 + $0x38] sm:$0xff]
    %v1188 = vld [vmem:[%s2 + $0x40] sm:$0xff]
    %v1189 = vld [vmem:[%s2 + $0x48] sm:$0xff]
    %v1190 = vld [vmem:[%s2 + $0x50] sm:$0xff]
    %v1191 = vld [vmem:[%s2 + $0x58] sm:$0xff]
    %v1192 = vld [vmem:[%s2 + $0x60] sm:$0xff]
    %v1193 = vld [vmem:[%s2 + $0x68] sm:$0xff]
    %v1194 = vld [vmem:[%s2 + $0x70] sm:$0xff]
    %v1195 = vld [vmem:[%s2 + $0x78] sm:$0xff]
    %v1196 = vld [vmem:[%s2 + $0x80] sm:$0xff]
    %v1197 = vld [vmem:[%s2 + $0x88] sm:$0xff]
    %v1198 = vld [vmem:[%s2 + $0x90] sm:$0xff]
    %v1199 = vld [vmem:[%s2 + $0x98] sm:$0xff]
    %v1200 = vld [vmem:[%s2 + $0xa0] sm:$0xff]
    %v1201 = vld [vmem:[%s2 + $0xa8] sm:$0xff]
    %v1202 = vld [vmem:[%s2 + $0xb0] sm:$0xff]
    %v1203 = vld [vmem:[%s2 + $0xb8] sm:$0xff]
    %v1204 = vld [vmem:[%s2 + $0xc0] sm:$0xff]
    %v1205 = vld [vmem:[%s2 + $0xc8] sm:$0xff]
    %v1206 = vld [vmem:[%s2 + $0xd0] sm:$0xff]
    %v1207 = vld [vmem:[%s2 + $0xd8] sm:$0xff]
    %v1208 = vld [vmem:[%s2 + $0xe0] sm:$0xff]
    %v1209 = vld [vmem:[%s2 + $0xe8] sm:$0xff]
    %v1210 = vld [vmem:[%s2 + $0xf0] sm:$0xff]
    %v1211 = vld [vmem:[%s2 + $0xf8] sm:$0xff]
    %v1212 = vld [vmem:[%s2 + $0x100] sm:$0xff]
    %v1213 = vld [vmem:[%s2 + $0x108] sm:$0xff]
    %v1214 = vld [vmem:[%s2 + $0x110] sm:$0xff]
    %v1215 = vld [vmem:[%s2 + $0x118] sm:$0xff]
    %v1216 = vld [vmem:[%s2 + $0x120] sm:$0xff]
    %v1217 = vld [vmem:[%s2 + $0x128] sm:$0xff]
    %v1218 = vld [vmem:[%s2 + $0x130] sm:$0xff]
    %v1219 = vld [vmem:[%s2 + $0x138] sm:$0xff]
    %v1220 = vld [vmem:[%s2 + $0x140] sm:$0xff]
    %v1221 = vld [vmem:[%s2 + $0x148] sm:$0xff]
    %v1222 = vld [vmem:[%s2 + $0x150] sm:$0xff]
    %v1223 = vld [vmem:[%s2 + $0x158] sm:$0xff]
    %v1224 = vld [vmem:[%s2 + $0x160] sm:$0xff]
    %v1225 = vld [vmem:[%s2 + $0x168] sm:$0xff]
    %v1226 = vld [vmem:[%s2 + $0x170] sm:$0xff]
    %v1227 = vld [vmem:[%s2 + $0x178] sm:$0xff]
    %v1228 = vld [vmem:[%s2 + $0x180] sm:$0xff]
    %v1229 = vld [vmem:[%s2 + $0x188] sm:$0xff]
    %v1230 = vld [vmem:[%s2 + $0x190] sm:$0xff]
    %v1231 = vld [vmem:[%s2 + $0x198] sm:$0xff]
    %v1232 = vld [vmem:[%s2 + $0x1a0] sm:$0xff]
    %v1233 = vld [vmem:[%s2 + $0x1a8] sm:$0xff]
    %v1234 = vld [vmem:[%s2 + $0x1b0] sm:$0xff]
    %v1235 = vld [vmem:[%s2 + $0x1b8] sm:$0xff]
    %v1236 = vld [vmem:[%s2 + $0x1c0] sm:$0xff]
    %v1237 = vld [vmem:[%s2 + $0x1c8] sm:$0xff]
    %v1238 = vld [vmem:[%s2 + $0x1d0] sm:$0xff]
    %v1239 = vld [vmem:[%s2 + $0x1d8] sm:$0xff]
    %v1240 = vld [vmem:[%s2 + $0x1e0] sm:$0xff]
    %v1241 = vld [vmem:[%s2 + $0x1e8] sm:$0xff]
    %v1242 = vld [vmem:[%s2 + $0x1f0] sm:$0xff]
    %v1243 = vld [vmem:[%s2 + $0x1f8] sm:$0xff]
    %v1244 = vld [vmem:[%s2 + $0x200] sm:$0xff]
    %v1245 = vld [vmem:[%s2 + $0x208] sm:$0xff]
    %v1246 = vld [vmem:[%s2 + $0x210] sm:$0xff]
    %v1247 = vld [vmem:[%s2 + $0x218] sm:$0xff]
    %v1248 = vld [vmem:[%s2 + $0x220] sm:$0xff]
    %v1249 = vld [vmem:[%s2 + $0x228] sm:$0xff]
    %v1250 = vld [vmem:[%s2 + $0x230] sm:$0xff]
    %v1251 = vld [vmem:[%s2 + $0x238] sm:$0xff]
    %v1252 = vld [vmem:[%s2 + $0x240] sm:$0xff]
    %v1253 = vld [vmem:[%s2 + $0x248] sm:$0xff]
    %v1254 = vld [vmem:[%s2 + $0x250] sm:$0xff]
    %v1255 = vld [vmem:[%s2 + $0x258] sm:$0xff]
    %v1256 = vld [vmem:[%s2 + $0x260] sm:$0xff]
    %v1257 = vld [vmem:[%s2 + $0x268] sm:$0xff]
    %v1258 = vld [vmem:[%s2 + $0x270] sm:$0xff]
    %v1259 = vld [vmem:[%s2 + $0x278] sm:$0xff]
    %v1260 = vld [vmem:[%s2 + $0x280] sm:$0xff]
    %v1261 = vld [vmem:[%s2 + $0x288] sm:$0xff]
    %v1262 = vld [vmem:[%s2 + $0x290] sm:$0xff]
    %v1263 = vld [vmem:[%s2 + $0x298] sm:$0xff]
    %v1264 = vld [vmem:[%s2 + $0x2a0] sm:$0xff]
    %v1265 = vld [vmem:[%s2 + $0x2a8] sm:$0xff]
    %v1266 = vld [vmem:[%s2 + $0x2b0] sm:$0xff]
    %v1267 = vld [vmem:[%s2 + $0x2b8] sm:$0xff]
    %v1268 = vld [vmem:[%s2 + $0x2c0] sm:$0xff]
    %v1269 = vld [vmem:[%s2 + $0x2c8] sm:$0xff]
    %v1270 = vld [vmem:[%s2 + $0x2d0] sm:$0xff]
    %v1271 = vld [vmem:[%s2 + $0x2d8] sm:$0xff]
    %v1272 = vld [vmem:[%s2 + $0x2e0] sm:$0xff]
    %v1273 = vld [vmem:[%s2 + $0x2e8] sm:$0xff]
    %v1274 = vld [vmem:[%s2 + $0x2f0] sm:$0xff]
    %v1275 = vld [vmem:[%s2 + $0x2f8] sm:$0xff]
    %v1276 = vpack.c.bf16 %v1117, %v1116
    %v1277 = vpack.c.bf16 %v1119, %v1118
    %v1278 = vpack.c.bf16 %v1121, %v1120
    %v1279 = vpack.c.bf16 %v1123, %v1122
    %v1280 = vpack.c.bf16 %v1125, %v1124
    %v1281 = vpack.c.bf16 %v1127, %v1126
    %v1282 = vpack.c.bf16 %v1129, %v1128
    %v1283 = vpack.c.bf16 %v1131, %v1130
    %v1284 = vpack.c.bf16 %v1133, %v1132
    %v1285 = vpack.c.bf16 %v1135, %v1134
    %v1286 = vpack.c.bf16 %v1137, %v1136
    %v1287 = vpack.c.bf16 %v1139, %v1138
    %v1288 = vpack.c.bf16 %v1141, %v1140
    %v1289 = vpack.c.bf16 %v1143, %v1142
    %v1290 = vpack.c.bf16 %v1145, %v1144
    %v1291 = vpack.c.bf16 %v1147, %v1146
    %v1292 = vpack.c.bf16 %v1149, %v1148
    %v1293 = vpack.c.bf16 %v1151, %v1150
    %v1294 = vpack.c.bf16 %v1153, %v1152
    %v1295 = vpack.c.bf16 %v1155, %v1154
    %v1296 = vpack.c.bf16 %v1157, %v1156
    %v1297 = vpack.c.bf16 %v1159, %v1158
    %v1298 = vpack.c.bf16 %v1161, %v1160
    %v1299 = vpack.c.bf16 %v1163, %v1162
    %v1300 = vpack.c.bf16 %v1165, %v1164
    %v1301 = vpack.c.bf16 %v1167, %v1166
    %v1302 = vpack.c.bf16 %v1169, %v1168
    %v1303 = vpack.c.bf16 %v1171, %v1170
    %v1304 = vpack.c.bf16 %v1173, %v1172
    %v1305 = vpack.c.bf16 %v1175, %v1174
    %v1306 = vpack.c.bf16 %v1177, %v1176
    %v1307 = vpack.c.bf16 %v1179, %v1178
    %1309 = vset.pattern.permute.xlu0 0
    %1310 = vperm.xlu0 %1309, %v83
    %v1311 = vpop.permute.xlu0 %1310
    %1314 = vset.pattern.permute.xlu0 0
    %1315 = vperm.xlu0 %1314, %v84
    %v1316 = vpop.permute.xlu0 %1315
    %1319 = vset.pattern.permute.xlu0 0
    %1320 = vperm.xlu0 %1319, %v85
    %v1321 = vpop.permute.xlu0 %1320
    %1324 = vset.pattern.permute.xlu0 0
    %1325 = vperm.xlu0 %1324, %v86
    %v1326 = vpop.permute.xlu0 %1325
    %1329 = vset.pattern.permute.xlu0 0
    %1330 = vperm.xlu0 %1329, %v87
    %v1331 = vpop.permute.xlu0 %1330
    %1334 = vset.pattern.permute.xlu0 0
    %1335 = vperm.xlu0 %1334, %v88
    %v1336 = vpop.permute.xlu0 %1335
    %1339 = vset.pattern.permute.xlu0 0
    %1340 = vperm.xlu0 %1339, %v89
    %v1341 = vpop.permute.xlu0 %1340
    %1344 = vset.pattern.permute.xlu0 0
    %1345 = vperm.xlu0 %1344, %v90
    %v1346 = vpop.permute.xlu0 %1345
    %1349 = vset.pattern.permute.xlu0 0
    %1350 = vperm.xlu0 %1349, %v91
    %v1351 = vpop.permute.xlu0 %1350
    %1354 = vset.pattern.permute.xlu0 0
    %1355 = vperm.xlu0 %1354, %v92
    %v1356 = vpop.permute.xlu0 %1355
    %1359 = vset.pattern.permute.xlu0 0
    %1360 = vperm.xlu0 %1359, %v93
    %v1361 = vpop.permute.xlu0 %1360
    %1364 = vset.pattern.permute.xlu0 0
    %1365 = vperm.xlu0 %1364, %v94
    %v1366 = vpop.permute.xlu0 %1365
    %1369 = vset.pattern.permute.xlu0 0
    %1370 = vperm.xlu0 %1369, %v95
    %v1371 = vpop.permute.xlu0 %1370
    %1374 = vset.pattern.permute.xlu0 0
    %1375 = vperm.xlu0 %1374, %v96
    %v1376 = vpop.permute.xlu0 %1375
    %1379 = vset.pattern.permute.xlu0 0
    %1380 = vperm.xlu0 %1379, %v97
    %v1381 = vpop.permute.xlu0 %1380
    %1384 = vset.pattern.permute.xlu0 0
    %1385 = vperm.xlu0 %1384, %v98
    %v1386 = vpop.permute.xlu0 %1385
    %1389 = vset.pattern.permute.xlu0 0
    %1390 = vperm.xlu0 %1389, %v99
    %v1391 = vpop.permute.xlu0 %1390
    %1394 = vset.pattern.permute.xlu0 0
    %1395 = vperm.xlu0 %1394, %v100
    %v1396 = vpop.permute.xlu0 %1395
    %1399 = vset.pattern.permute.xlu0 0
    %1400 = vperm.xlu0 %1399, %v101
    %v1401 = vpop.permute.xlu0 %1400
    %1404 = vset.pattern.permute.xlu0 0
    %1405 = vperm.xlu0 %1404, %v102
    %v1406 = vpop.permute.xlu0 %1405
    %1409 = vset.pattern.permute.xlu0 0
    %1410 = vperm.xlu0 %1409, %v103
    %v1411 = vpop.permute.xlu0 %1410
    %1414 = vset.pattern.permute.xlu0 0
    %1415 = vperm.xlu0 %1414, %v104
    %v1416 = vpop.permute.xlu0 %1415
    %1419 = vset.pattern.permute.xlu0 0
    %1420 = vperm.xlu0 %1419, %v105
    %v1421 = vpop.permute.xlu0 %1420
    %1424 = vset.pattern.permute.xlu0 0
    %1425 = vperm.xlu0 %1424, %v106
    %v1426 = vpop.permute.xlu0 %1425
    %1429 = vset.pattern.permute.xlu0 0
    %1430 = vperm.xlu0 %1429, %v107
    %v1431 = vpop.permute.xlu0 %1430
    %1434 = vset.pattern.permute.xlu0 0
    %1435 = vperm.xlu0 %1434, %v108
    %v1436 = vpop.permute.xlu0 %1435
    %1439 = vset.pattern.permute.xlu0 0
    %1440 = vperm.xlu0 %1439, %v109
    %v1441 = vpop.permute.xlu0 %1440
    %1444 = vset.pattern.permute.xlu0 0
    %1445 = vperm.xlu0 %1444, %v110
    %v1446 = vpop.permute.xlu0 %1445
    %1449 = vset.pattern.permute.xlu0 0
    %1450 = vperm.xlu0 %1449, %v111
    %v1451 = vpop.permute.xlu0 %1450
    %1454 = vset.pattern.permute.xlu0 0
    %1455 = vperm.xlu0 %1454, %v112
    %v1456 = vpop.permute.xlu0 %1455
    %1459 = vset.pattern.permute.xlu0 0
    %1460 = vperm.xlu0 %1459, %v113
    %v1461 = vpop.permute.xlu0 %1460
    %1464 = vset.pattern.permute.xlu0 0
    %1465 = vperm.xlu0 %1464, %v114
    %v1466 = vpop.permute.xlu0 %1465
    %1469 = vset.pattern.permute.xlu0 0
    %1470 = vperm.xlu0 %1469, %v115
    %v1471 = vpop.permute.xlu0 %1470
    %1474 = vset.pattern.permute.xlu0 0
    %1475 = vperm.xlu0 %1474, %v116
    %v1476 = vpop.permute.xlu0 %1475
    %1479 = vset.pattern.permute.xlu0 0
    %1480 = vperm.xlu0 %1479, %v117
    %v1481 = vpop.permute.xlu0 %1480
    %1484 = vset.pattern.permute.xlu0 0
    %1485 = vperm.xlu0 %1484, %v118
    %v1486 = vpop.permute.xlu0 %1485
    %1489 = vset.pattern.permute.xlu0 0
    %1490 = vperm.xlu0 %1489, %v119
    %v1491 = vpop.permute.xlu0 %1490
    %1494 = vset.pattern.permute.xlu0 0
    %1495 = vperm.xlu0 %1494, %v120
    %v1496 = vpop.permute.xlu0 %1495
    %1499 = vset.pattern.permute.xlu0 0
    %1500 = vperm.xlu0 %1499, %v121
    %v1501 = vpop.permute.xlu0 %1500
    %1504 = vset.pattern.permute.xlu0 0
    %1505 = vperm.xlu0 %1504, %v122
    %v1506 = vpop.permute.xlu0 %1505
    %1509 = vset.pattern.permute.xlu0 0
    %1510 = vperm.xlu0 %1509, %v123
    %v1511 = vpop.permute.xlu0 %1510
    %1514 = vset.pattern.permute.xlu0 0
    %1515 = vperm.xlu0 %1514, %v124
    %v1516 = vpop.permute.xlu0 %1515
    %1519 = vset.pattern.permute.xlu0 0
    %1520 = vperm.xlu0 %1519, %v125
    %v1521 = vpop.permute.xlu0 %1520
    %1524 = vset.pattern.permute.xlu0 0
    %1525 = vperm.xlu0 %1524, %v126
    %v1526 = vpop.permute.xlu0 %1525
    %1529 = vset.pattern.permute.xlu0 0
    %1530 = vperm.xlu0 %1529, %v127
    %v1531 = vpop.permute.xlu0 %1530
    %1534 = vset.pattern.permute.xlu0 0
    %1535 = vperm.xlu0 %1534, %v128
    %v1536 = vpop.permute.xlu0 %1535
    %1539 = vset.pattern.permute.xlu0 0
    %1540 = vperm.xlu0 %1539, %v129
    %v1541 = vpop.permute.xlu0 %1540
    %1544 = vset.pattern.permute.xlu0 0
    %1545 = vperm.xlu0 %1544, %v130
    %v1546 = vpop.permute.xlu0 %1545
    %v1644 = vunpack.c.l.b16 %v1180
    %v1645 = vunpack.c.h.b16 %v1180
    %v1646 = vunpack.c.l.b16 %v1181
    %v1647 = vunpack.c.h.b16 %v1181
    %v1648 = vunpack.c.l.b16 %v1182
    %v1649 = vunpack.c.h.b16 %v1182
    %v1650 = vunpack.c.l.b16 %v1183
    %v1651 = vunpack.c.h.b16 %v1183
    %v1652 = vunpack.c.l.b16 %v1184
    %v1653 = vunpack.c.h.b16 %v1184
    %v1654 = vunpack.c.l.b16 %v1185
    %v1655 = vunpack.c.h.b16 %v1185
    %v1656 = vunpack.c.l.b16 %v1186
    %v1657 = vunpack.c.h.b16 %v1186
    %v1658 = vunpack.c.l.b16 %v1187
    %v1659 = vunpack.c.h.b16 %v1187
    %v1660 = vunpack.c.l.b16 %v1188
    %v1661 = vunpack.c.h.b16 %v1188
    %v1662 = vunpack.c.l.b16 %v1189
    %v1663 = vunpack.c.h.b16 %v1189
    %v1664 = vunpack.c.l.b16 %v1190
    %v1665 = vunpack.c.h.b16 %v1190
    %v1666 = vunpack.c.l.b16 %v1191
    %v1667 = vunpack.c.h.b16 %v1191
    %v1668 = vunpack.c.l.b16 %v1192
    %v1669 = vunpack.c.h.b16 %v1192
    %v1670 = vunpack.c.l.b16 %v1193
    %v1671 = vunpack.c.h.b16 %v1193
    %v1672 = vunpack.c.l.b16 %v1194
    %v1673 = vunpack.c.h.b16 %v1194
    %v1674 = vunpack.c.l.b16 %v1195
    %v1675 = vunpack.c.h.b16 %v1195
    %v1676 = vunpack.c.l.b16 %v1196
    %v1677 = vunpack.c.h.b16 %v1196
    %v1678 = vunpack.c.l.b16 %v1197
    %v1679 = vunpack.c.h.b16 %v1197
    %v1680 = vunpack.c.l.b16 %v1198
    %v1681 = vunpack.c.h.b16 %v1198
    %v1682 = vunpack.c.l.b16 %v1199
    %v1683 = vunpack.c.h.b16 %v1199
    %v1684 = vunpack.c.l.b16 %v1200
    %v1685 = vunpack.c.h.b16 %v1200
    %v1686 = vunpack.c.l.b16 %v1201
    %v1687 = vunpack.c.h.b16 %v1201
    %v1688 = vunpack.c.l.b16 %v1202
    %v1689 = vunpack.c.h.b16 %v1202
    %v1690 = vunpack.c.l.b16 %v1203
    %v1691 = vunpack.c.h.b16 %v1203
    %v1692 = vunpack.c.l.b16 %v1204
    %v1693 = vunpack.c.h.b16 %v1204
    %v1694 = vunpack.c.l.b16 %v1205
    %v1695 = vunpack.c.h.b16 %v1205
    %v1696 = vunpack.c.l.b16 %v1206
    %v1697 = vunpack.c.h.b16 %v1206
    %v1698 = vunpack.c.l.b16 %v1207
    %v1699 = vunpack.c.h.b16 %v1207
    %v1700 = vunpack.c.l.b16 %v1208
    %v1701 = vunpack.c.h.b16 %v1208
    %v1702 = vunpack.c.l.b16 %v1209
    %v1703 = vunpack.c.h.b16 %v1209
    %v1704 = vunpack.c.l.b16 %v1210
    %v1705 = vunpack.c.h.b16 %v1210
    %v1706 = vunpack.c.l.b16 %v1211
    %v1707 = vunpack.c.h.b16 %v1211
    %v1708 = vunpack.c.l.b16 %v1212
    %v1709 = vunpack.c.h.b16 %v1212
    %v1710 = vunpack.c.l.b16 %v1213
    %v1711 = vunpack.c.h.b16 %v1213
    %v1712 = vunpack.c.l.b16 %v1214
    %v1713 = vunpack.c.h.b16 %v1214
    %v1714 = vunpack.c.l.b16 %v1215
    %v1715 = vunpack.c.h.b16 %v1215
    %v1716 = vunpack.c.l.b16 %v1216
    %v1717 = vunpack.c.h.b16 %v1216
    %v1718 = vunpack.c.l.b16 %v1217
    %v1719 = vunpack.c.h.b16 %v1217
    %v1720 = vunpack.c.l.b16 %v1218
    %v1721 = vunpack.c.h.b16 %v1218
    %v1722 = vunpack.c.l.b16 %v1219
    %v1723 = vunpack.c.h.b16 %v1219
    %v1724 = vunpack.c.l.b16 %v1220
    %v1725 = vunpack.c.h.b16 %v1220
    %v1726 = vunpack.c.l.b16 %v1221
    %v1727 = vunpack.c.h.b16 %v1221
    %v1728 = vunpack.c.l.b16 %v1222
    %v1729 = vunpack.c.h.b16 %v1222
    %v1730 = vunpack.c.l.b16 %v1223
    %v1731 = vunpack.c.h.b16 %v1223
    %v1732 = vunpack.c.l.b16 %v1224
    %v1733 = vunpack.c.h.b16 %v1224
    %v1734 = vunpack.c.l.b16 %v1225
    %v1735 = vunpack.c.h.b16 %v1225
    %v1736 = vunpack.c.l.b16 %v1226
    %v1737 = vunpack.c.h.b16 %v1226
    %v1738 = vunpack.c.l.b16 %v1227
    %v1739 = vunpack.c.h.b16 %v1227
    %v1740 = vunpack.c.l.b16 %v1228
    %v1741 = vunpack.c.h.b16 %v1228
    %v1742 = vunpack.c.l.b16 %v1229
    %v1743 = vunpack.c.h.b16 %v1229
    %v1744 = vunpack.c.l.b16 %v1230
    %v1745 = vunpack.c.h.b16 %v1230
    %v1746 = vunpack.c.l.b16 %v1231
    %v1747 = vunpack.c.h.b16 %v1231
    %v1748 = vunpack.c.l.b16 %v1232
    %v1749 = vunpack.c.h.b16 %v1232
    %v1750 = vunpack.c.l.b16 %v1233
    %v1751 = vunpack.c.h.b16 %v1233
    %v1752 = vunpack.c.l.b16 %v1234
    %v1753 = vunpack.c.h.b16 %v1234
    %v1754 = vunpack.c.l.b16 %v1235
    %v1755 = vunpack.c.h.b16 %v1235
    %v1756 = vunpack.c.l.b16 %v1236
    %v1757 = vunpack.c.h.b16 %v1236
    %v1758 = vunpack.c.l.b16 %v1237
    %v1759 = vunpack.c.h.b16 %v1237
    %v1760 = vunpack.c.l.b16 %v1238
    %v1761 = vunpack.c.h.b16 %v1238
    %v1762 = vunpack.c.l.b16 %v1239
    %v1763 = vunpack.c.h.b16 %v1239
    %v1764 = vunpack.c.l.b16 %v1240
    %v1765 = vunpack.c.h.b16 %v1240
    %v1766 = vunpack.c.l.b16 %v1241
    %v1767 = vunpack.c.h.b16 %v1241
    %v1768 = vunpack.c.l.b16 %v1242
    %v1769 = vunpack.c.h.b16 %v1242
    %v1770 = vunpack.c.l.b16 %v1243
    %v1771 = vunpack.c.h.b16 %v1243
    %v1772 = vunpack.c.l.b16 %v1244
    %v1773 = vunpack.c.h.b16 %v1244
    %v1774 = vunpack.c.l.b16 %v1245
    %v1775 = vunpack.c.h.b16 %v1245
    %v1776 = vunpack.c.l.b16 %v1246
    %v1777 = vunpack.c.h.b16 %v1246
    %v1778 = vunpack.c.l.b16 %v1247
    %v1779 = vunpack.c.h.b16 %v1247
    %v1780 = vunpack.c.l.b16 %v1248
    %v1781 = vunpack.c.h.b16 %v1248
    %v1782 = vunpack.c.l.b16 %v1249
    %v1783 = vunpack.c.h.b16 %v1249
    %v1784 = vunpack.c.l.b16 %v1250
    %v1785 = vunpack.c.h.b16 %v1250
    %v1786 = vunpack.c.l.b16 %v1251
    %v1787 = vunpack.c.h.b16 %v1251
    %v1788 = vunpack.c.l.b16 %v1252
    %v1789 = vunpack.c.h.b16 %v1252
    %v1790 = vunpack.c.l.b16 %v1253
    %v1791 = vunpack.c.h.b16 %v1253
    %v1792 = vunpack.c.l.b16 %v1254
    %v1793 = vunpack.c.h.b16 %v1254
    %v1794 = vunpack.c.l.b16 %v1255
    %v1795 = vunpack.c.h.b16 %v1255
    %v1796 = vunpack.c.l.b16 %v1256
    %v1797 = vunpack.c.h.b16 %v1256
    %v1798 = vunpack.c.l.b16 %v1257
    %v1799 = vunpack.c.h.b16 %v1257
    %v1800 = vunpack.c.l.b16 %v1258
    %v1801 = vunpack.c.h.b16 %v1258
    %v1802 = vunpack.c.l.b16 %v1259
    %v1803 = vunpack.c.h.b16 %v1259
    %v1804 = vunpack.c.l.b16 %v1260
    %v1805 = vunpack.c.h.b16 %v1260
    %v1806 = vunpack.c.l.b16 %v1261
    %v1807 = vunpack.c.h.b16 %v1261
    %v1808 = vunpack.c.l.b16 %v1262
    %v1809 = vunpack.c.h.b16 %v1262
    %v1810 = vunpack.c.l.b16 %v1263
    %v1811 = vunpack.c.h.b16 %v1263
    %v1812 = vunpack.c.l.b16 %v1264
    %v1813 = vunpack.c.h.b16 %v1264
    %v1814 = vunpack.c.l.b16 %v1265
    %v1815 = vunpack.c.h.b16 %v1265
    %v1816 = vunpack.c.l.b16 %v1266
    %v1817 = vunpack.c.h.b16 %v1266
    %v1818 = vunpack.c.l.b16 %v1267
    %v1819 = vunpack.c.h.b16 %v1267
    %v1820 = vunpack.c.l.b16 %v1268
    %v1821 = vunpack.c.h.b16 %v1268
    %v1822 = vunpack.c.l.b16 %v1269
    %v1823 = vunpack.c.h.b16 %v1269
    %v1824 = vunpack.c.l.b16 %v1270
    %v1825 = vunpack.c.h.b16 %v1270
    %v1826 = vunpack.c.l.b16 %v1271
    %v1827 = vunpack.c.h.b16 %v1271
    %v1828 = vunpack.c.l.b16 %v1272
    %v1829 = vunpack.c.h.b16 %v1272
    %v1830 = vunpack.c.l.b16 %v1273
    %v1831 = vunpack.c.h.b16 %v1273
    %v1832 = vunpack.c.l.b16 %v1274
    %v1833 = vunpack.c.h.b16 %v1274
    %v1834 = vunpack.c.l.b16 %v1275
    %v1835 = vunpack.c.h.b16 %v1275
    %v1836 = vpack.c.b16 %v1648, %v1644
    %v1837 = vpack.c.b16 %v1649, %v1645
    %v1838 = vpack.c.b16 %v1650, %v1646
    %v1839 = vpack.c.b16 %v1651, %v1647
    %v1840 = vpack.c.b16 %v1656, %v1652
    %v1841 = vpack.c.b16 %v1657, %v1653
    %v1842 = vpack.c.b16 %v1658, %v1654
    %v1843 = vpack.c.b16 %v1659, %v1655
    %v1844 = vpack.c.b16 %v1664, %v1660
    %v1845 = vpack.c.b16 %v1665, %v1661
    %v1846 = vpack.c.b16 %v1666, %v1662
    %v1847 = vpack.c.b16 %v1667, %v1663
    %v1848 = vpack.c.b16 %v1672, %v1668
    %v1849 = vpack.c.b16 %v1673, %v1669
    %v1850 = vpack.c.b16 %v1674, %v1670
    %v1851 = vpack.c.b16 %v1675, %v1671
    %v1852 = vpack.c.b16 %v1680, %v1676
    %v1853 = vpack.c.b16 %v1681, %v1677
    %v1854 = vpack.c.b16 %v1682, %v1678
    %v1855 = vpack.c.b16 %v1683, %v1679
    %v1856 = vpack.c.b16 %v1688, %v1684
    %v1857 = vpack.c.b16 %v1689, %v1685
    %v1858 = vpack.c.b16 %v1690, %v1686
    %v1859 = vpack.c.b16 %v1691, %v1687
    %v1860 = vpack.c.b16 %v1696, %v1692
    %v1861 = vpack.c.b16 %v1697, %v1693
    %v1862 = vpack.c.b16 %v1698, %v1694
    %v1863 = vpack.c.b16 %v1699, %v1695
    %v1864 = vpack.c.b16 %v1704, %v1700
    %v1865 = vpack.c.b16 %v1705, %v1701
    %v1866 = vpack.c.b16 %v1706, %v1702
    %v1867 = vpack.c.b16 %v1707, %v1703
    %v1868 = vpack.c.b16 %v1712, %v1708
    %v1869 = vpack.c.b16 %v1713, %v1709
    %v1870 = vpack.c.b16 %v1714, %v1710
    %v1871 = vpack.c.b16 %v1715, %v1711
    %v1872 = vpack.c.b16 %v1720, %v1716
    %v1873 = vpack.c.b16 %v1721, %v1717
    %v1874 = vpack.c.b16 %v1722, %v1718
    %v1875 = vpack.c.b16 %v1723, %v1719
    %v1876 = vpack.c.b16 %v1728, %v1724
    %v1877 = vpack.c.b16 %v1729, %v1725
    %v1878 = vpack.c.b16 %v1730, %v1726
    %v1879 = vpack.c.b16 %v1731, %v1727
    %v1880 = vpack.c.b16 %v1736, %v1732
    %v1881 = vpack.c.b16 %v1737, %v1733
    %v1882 = vpack.c.b16 %v1738, %v1734
    %v1883 = vpack.c.b16 %v1739, %v1735
    %v1884 = vpack.c.b16 %v1744, %v1740
    %v1885 = vpack.c.b16 %v1745, %v1741
    %v1886 = vpack.c.b16 %v1746, %v1742
    %v1887 = vpack.c.b16 %v1747, %v1743
    %v1888 = vpack.c.b16 %v1752, %v1748
    %v1889 = vpack.c.b16 %v1753, %v1749
    %v1890 = vpack.c.b16 %v1754, %v1750
    %v1891 = vpack.c.b16 %v1755, %v1751
    %v1892 = vpack.c.b16 %v1760, %v1756
    %v1893 = vpack.c.b16 %v1761, %v1757
    %v1894 = vpack.c.b16 %v1762, %v1758
    %v1895 = vpack.c.b16 %v1763, %v1759
    %v1896 = vpack.c.b16 %v1768, %v1764
    %v1897 = vpack.c.b16 %v1769, %v1765
    %v1898 = vpack.c.b16 %v1770, %v1766
    %v1899 = vpack.c.b16 %v1771, %v1767
    %v1900 = vpack.c.b16 %v1776, %v1772
    %v1901 = vpack.c.b16 %v1777, %v1773
    %v1902 = vpack.c.b16 %v1778, %v1774
    %v1903 = vpack.c.b16 %v1779, %v1775
    %v1904 = vpack.c.b16 %v1784, %v1780
    %v1905 = vpack.c.b16 %v1785, %v1781
    %v1906 = vpack.c.b16 %v1786, %v1782
    %v1907 = vpack.c.b16 %v1787, %v1783
    %v1908 = vpack.c.b16 %v1792, %v1788
    %v1909 = vpack.c.b16 %v1793, %v1789
    %v1910 = vpack.c.b16 %v1794, %v1790
    %v1911 = vpack.c.b16 %v1795, %v1791
    %v1912 = vpack.c.b16 %v1800, %v1796
    %v1913 = vpack.c.b16 %v1801, %v1797
    %v1914 = vpack.c.b16 %v1802, %v1798
    %v1915 = vpack.c.b16 %v1803, %v1799
    %v1916 = vpack.c.b16 %v1808, %v1804
    %v1917 = vpack.c.b16 %v1809, %v1805
    %v1918 = vpack.c.b16 %v1810, %v1806
    %v1919 = vpack.c.b16 %v1811, %v1807
    %v1920 = vpack.c.b16 %v1816, %v1812
    %v1921 = vpack.c.b16 %v1817, %v1813
    %v1922 = vpack.c.b16 %v1818, %v1814
    %v1923 = vpack.c.b16 %v1819, %v1815
    %v1924 = vpack.c.b16 %v1824, %v1820
    %v1925 = vpack.c.b16 %v1825, %v1821
    %v1926 = vpack.c.b16 %v1826, %v1822
    %v1927 = vpack.c.b16 %v1827, %v1823
    %v1928 = vpack.c.b16 %v1832, %v1828
    %v1929 = vpack.c.b16 %v1833, %v1829
    %v1930 = vpack.c.b16 %v1834, %v1830
    %v1931 = vpack.c.b16 %v1835, %v1831
    %2028 = vmatprep.subr.bf16.mxu0 0
    %2029 = vmatpush1.bf16.msra.mxu0 %v1283
    %2030 = vmatprep.subr.bf16.mxu0 0
    %2031 = vmatpush1.bf16.msra.mxu0 %v1282
    %2032 = vmatprep.subr.bf16.mxu0 0
    %2033 = vmatpush1.bf16.msra.mxu0 %v1281
    %2034 = vmatprep.subr.bf16.mxu0 0
    %2035 = vmatpush1.bf16.msra.mxu0 %v1280
    %2036 = vmatprep.subr.bf16.mxu0 0
    %2037 = vmatpush1.bf16.msra.mxu0 %v1279
    %2038 = vmatprep.subr.bf16.mxu0 0
    %2039 = vmatpush1.bf16.msra.mxu0 %v1278
    %2040 = vmatprep.subr.bf16.mxu0 0
    %2041 = vmatpush1.bf16.msra.mxu0 %v1277
    %2042 = vmatprep.subr.bf16.mxu0 0
    %2043 = vmatpush1.bf16.msra.mxu0 %v1276
    %2044 = vmatprep.subr.bf16.mxu0 0
    %2045 = vmatpush2.bf16.msra.mxu0 %v1291
    %2046 = vmatprep.subr.bf16.mxu0 0
    %2047 = vmatpush2.bf16.msra.mxu0 %v1290
    %2048 = vmatprep.subr.bf16.mxu0 0
    %2049 = vmatpush2.bf16.msra.mxu0 %v1289
    %2050 = vmatprep.subr.bf16.mxu0 0
    %2051 = vmatpush2.bf16.msra.mxu0 %v1288
    %2052 = vmatprep.subr.bf16.mxu0 0
    %2053 = vmatpush2.bf16.msra.mxu0 %v1287
    %2054 = vmatprep.subr.bf16.mxu0 0
    %2055 = vmatpush2.bf16.msra.mxu0 %v1286
    %2056 = vmatprep.subr.bf16.mxu0 0
    %2057 = vmatpush2.bf16.msra.mxu0 %v1285
    %2058 = vmatprep.subr.bf16.mxu0 0
    %2059 = vmatpush2.bf16.msra.mxu0 %v1284
    %2060 = vmatprep.mubr.bf16.mxu0 %v1837
    %2061 = vmatmul.mubr.bf16.gmra.mxu0 %v1836
    %v2062 = vpop.f32.mrf.mxu0
    %v2063 = vadd.f32 %v1311, %v2062
    %v2064 = vpop.f32.mrf.mxu0
    %v2065 = vpop.f32.mrf.mxu0
    %v2066 = vadd.f32 %v1316, %v2065
    %v2067 = vpop.f32.mrf.mxu0
    %2068 = vmatprep.mubr.bf16.mxu0 %v1841
    %2069 = vmatmul.mubr.bf16.gmra.mxu0 %v1840
    %v2070 = vpop.f32.mrf.mxu0
    %v2071 = vadd.f32 %v1321, %v2070
    %v2072 = vpop.f32.mrf.mxu0
    %v2073 = vpop.f32.mrf.mxu0
    %v2074 = vadd.f32 %v1326, %v2073
    %v2075 = vpop.f32.mrf.mxu0
    %2076 = vmatprep.mubr.bf16.mxu0 %v1845
    %2077 = vmatmul.mubr.bf16.gmra.mxu0 %v1844
    %v2078 = vpop.f32.mrf.mxu0
    %v2079 = vadd.f32 %v1331, %v2078
    %v2080 = vpop.f32.mrf.mxu0
    %v2081 = vpop.f32.mrf.mxu0
    %v2082 = vadd.f32 %v1336, %v2081
    %v2083 = vpop.f32.mrf.mxu0
    %2084 = vmatprep.mubr.bf16.mxu0 %v1849
    %2085 = vmatmul.mubr.bf16.gmra.mxu0 %v1848
    %v2086 = vpop.f32.mrf.mxu0
    %v2087 = vadd.f32 %v1341, %v2086
    %v2088 = vpop.f32.mrf.mxu0
    %v2089 = vpop.f32.mrf.mxu0
    %v2090 = vadd.f32 %v1346, %v2089
    %v2091 = vpop.f32.mrf.mxu0
    %2092 = vmatprep.mubr.bf16.mxu0 %v1853
    %2093 = vmatmul.mubr.bf16.gmra.mxu0 %v1852
    %v2094 = vpop.f32.mrf.mxu0
    %v2095 = vadd.f32 %v1351, %v2094
    %v2096 = vpop.f32.mrf.mxu0
    %v2097 = vpop.f32.mrf.mxu0
    %v2098 = vadd.f32 %v1356, %v2097
    %v2099 = vpop.f32.mrf.mxu0
    %2100 = vmatprep.mubr.bf16.mxu0 %v1857
    %2101 = vmatmul.mubr.bf16.gmra.mxu0 %v1856
    %v2102 = vpop.f32.mrf.mxu0
    %v2103 = vadd.f32 %v1361, %v2102
    %v2104 = vpop.f32.mrf.mxu0
    %v2105 = vpop.f32.mrf.mxu0
    %v2106 = vadd.f32 %v1366, %v2105
    %v2107 = vpop.f32.mrf.mxu0
    %2108 = vmatprep.mubr.bf16.mxu0 %v1861
    %2109 = vmatmul.mubr.bf16.gmra.mxu0 %v1860
    %v2110 = vpop.f32.mrf.mxu0
    %v2111 = vadd.f32 %v1371, %v2110
    %v2112 = vpop.f32.mrf.mxu0
    %v2113 = vpop.f32.mrf.mxu0
    %v2114 = vadd.f32 %v1376, %v2113
    %v2115 = vpop.f32.mrf.mxu0
    %2116 = vmatprep.mubr.bf16.mxu0 %v1865
    %2117 = vmatmul.mubr.bf16.gmra.mxu0 %v1864
    %v2118 = vpop.f32.mrf.mxu0
    %v2119 = vadd.f32 %v1381, %v2118
    %v2120 = vpop.f32.mrf.mxu0
    %v2121 = vpop.f32.mrf.mxu0
    %v2122 = vadd.f32 %v1386, %v2121
    %v2123 = vpop.f32.mrf.mxu0
    %2124 = vmatprep.mubr.bf16.mxu0 %v1869
    %2125 = vmatmul.mubr.bf16.gmra.mxu0 %v1868
    %v2126 = vpop.f32.mrf.mxu0
    %v2127 = vadd.f32 %v1391, %v2126
    %v2128 = vpop.f32.mrf.mxu0
    %v2129 = vpop.f32.mrf.mxu0
    %v2130 = vadd.f32 %v1396, %v2129
    %v2131 = vpop.f32.mrf.mxu0
    %2132 = vmatprep.mubr.bf16.mxu0 %v1873
    %2133 = vmatmul.mubr.bf16.gmra.mxu0 %v1872
    %v2134 = vpop.f32.mrf.mxu0
    %v2135 = vadd.f32 %v1401, %v2134
    %v2136 = vpop.f32.mrf.mxu0
    %v2137 = vpop.f32.mrf.mxu0
    %v2138 = vadd.f32 %v1406, %v2137
    %v2139 = vpop.f32.mrf.mxu0
    %2140 = vmatprep.mubr.bf16.mxu0 %v1877
    %2141 = vmatmul.mubr.bf16.gmra.mxu0 %v1876
    %v2142 = vpop.f32.mrf.mxu0
    %v2143 = vadd.f32 %v1411, %v2142
    %v2144 = vpop.f32.mrf.mxu0
    %v2145 = vpop.f32.mrf.mxu0
    %v2146 = vadd.f32 %v1416, %v2145
    %v2147 = vpop.f32.mrf.mxu0
    %2148 = vmatprep.mubr.bf16.mxu0 %v1881
    %2149 = vmatmul.mubr.bf16.gmra.mxu0 %v1880
    %v2150 = vpop.f32.mrf.mxu0
    %v2151 = vadd.f32 %v1421, %v2150
    %v2152 = vpop.f32.mrf.mxu0
    %v2153 = vpop.f32.mrf.mxu0
    %v2154 = vadd.f32 %v1426, %v2153
    %v2155 = vpop.f32.mrf.mxu0
    %2156 = vmatprep.mubr.bf16.mxu0 %v1885
    %2157 = vmatmul.mubr.bf16.gmra.mxu0 %v1884
    %v2158 = vpop.f32.mrf.mxu0
    %v2159 = vadd.f32 %v1431, %v2158
    %v2160 = vpop.f32.mrf.mxu0
    %v2161 = vpop.f32.mrf.mxu0
    %v2162 = vadd.f32 %v1436, %v2161
    %v2163 = vpop.f32.mrf.mxu0
    %2164 = vmatprep.mubr.bf16.mxu0 %v1889
    %2165 = vmatmul.mubr.bf16.gmra.mxu0 %v1888
    %v2166 = vpop.f32.mrf.mxu0
    %v2167 = vadd.f32 %v1441, %v2166
    %v2168 = vpop.f32.mrf.mxu0
    %v2169 = vpop.f32.mrf.mxu0
    %v2170 = vadd.f32 %v1446, %v2169
    %v2171 = vpop.f32.mrf.mxu0
    %2172 = vmatprep.mubr.bf16.mxu0 %v1893
    %2173 = vmatmul.mubr.bf16.gmra.mxu0 %v1892
    %v2174 = vpop.f32.mrf.mxu0
    %v2175 = vadd.f32 %v1451, %v2174
    %v2176 = vpop.f32.mrf.mxu0
    %v2177 = vpop.f32.mrf.mxu0
    %v2178 = vadd.f32 %v1456, %v2177
    %v2179 = vpop.f32.mrf.mxu0
    %2180 = vmatprep.mubr.bf16.mxu0 %v1897
    %2181 = vmatmul.mubr.bf16.gmra.mxu0 %v1896
    %v2182 = vpop.f32.mrf.mxu0
    %v2183 = vadd.f32 %v1461, %v2182
    %v2184 = vpop.f32.mrf.mxu0
    %v2185 = vpop.f32.mrf.mxu0
    %v2186 = vadd.f32 %v1466, %v2185
    %v2187 = vpop.f32.mrf.mxu0
    %2188 = vmatprep.mubr.bf16.mxu0 %v1901
    %2189 = vmatmul.mubr.bf16.gmra.mxu0 %v1900
    %v2190 = vpop.f32.mrf.mxu0
    %v2191 = vadd.f32 %v1471, %v2190
    %v2192 = vpop.f32.mrf.mxu0
    %v2193 = vpop.f32.mrf.mxu0
    %v2194 = vadd.f32 %v1476, %v2193
    %v2195 = vpop.f32.mrf.mxu0
    %2196 = vmatprep.mubr.bf16.mxu0 %v1905
    %2197 = vmatmul.mubr.bf16.gmra.mxu0 %v1904
    %v2198 = vpop.f32.mrf.mxu0
    %v2199 = vadd.f32 %v1481, %v2198
    %v2200 = vpop.f32.mrf.mxu0
    %v2201 = vpop.f32.mrf.mxu0
    %v2202 = vadd.f32 %v1486, %v2201
    %v2203 = vpop.f32.mrf.mxu0
    %2204 = vmatprep.mubr.bf16.mxu0 %v1909
    %2205 = vmatmul.mubr.bf16.gmra.mxu0 %v1908
    %v2206 = vpop.f32.mrf.mxu0
    %v2207 = vadd.f32 %v1491, %v2206
    %v2208 = vpop.f32.mrf.mxu0
    %v2209 = vpop.f32.mrf.mxu0
    %v2210 = vadd.f32 %v1496, %v2209
    %v2211 = vpop.f32.mrf.mxu0
    %2212 = vmatprep.mubr.bf16.mxu0 %v1913
    %2213 = vmatmul.mubr.bf16.gmra.mxu0 %v1912
    %v2214 = vpop.f32.mrf.mxu0
    %v2215 = vadd.f32 %v1501, %v2214
    %v2216 = vpop.f32.mrf.mxu0
    %v2217 = vpop.f32.mrf.mxu0
    %v2218 = vadd.f32 %v1506, %v2217
    %v2219 = vpop.f32.mrf.mxu0
    %2220 = vmatprep.mubr.bf16.mxu0 %v1917
    %2221 = vmatmul.mubr.bf16.gmra.mxu0 %v1916
    %v2222 = vpop.f32.mrf.mxu0
    %v2223 = vadd.f32 %v1511, %v2222
    %v2224 = vpop.f32.mrf.mxu0
    %v2225 = vpop.f32.mrf.mxu0
    %v2226 = vadd.f32 %v1516, %v2225
    %v2227 = vpop.f32.mrf.mxu0
    %2228 = vmatprep.mubr.bf16.mxu0 %v1921
    %2229 = vmatmul.mubr.bf16.gmra.mxu0 %v1920
    %v2230 = vpop.f32.mrf.mxu0
    %v2231 = vadd.f32 %v1521, %v2230
    %v2232 = vpop.f32.mrf.mxu0
    %v2233 = vpop.f32.mrf.mxu0
    %v2234 = vadd.f32 %v1526, %v2233
    %v2235 = vpop.f32.mrf.mxu0
    %2236 = vmatprep.mubr.bf16.mxu0 %v1925
    %2237 = vmatmul.mubr.bf16.gmra.mxu0 %v1924
    %v2238 = vpop.f32.mrf.mxu0
    %v2239 = vadd.f32 %v1531, %v2238
    %v2240 = vpop.f32.mrf.mxu0
    %v2241 = vpop.f32.mrf.mxu0
    %v2242 = vadd.f32 %v1536, %v2241
    %v2243 = vpop.f32.mrf.mxu0
    %2244 = vmatprep.mubr.bf16.mxu0 %v1929
    %2245 = vmatmul.mubr.bf16.gmra.mxu0 %v1928
    %v2246 = vpop.f32.mrf.mxu0
    %v2247 = vadd.f32 %v1541, %v2246
    %v2248 = vpop.f32.mrf.mxu0
    %v2249 = vpop.f32.mrf.mxu0
    %v2250 = vadd.f32 %v1546, %v2249
    %v2251 = vpop.f32.mrf.mxu0
    %2252 = vdwg.mxu0
    %2253 = vmatprep.subr.bf16.mxu0 0
    %2254 = vmatpush1.bf16.msra.mxu0 %v1299
    %2255 = vmatprep.subr.bf16.mxu0 0
    %2256 = vmatpush1.bf16.msra.mxu0 %v1298
    %2257 = vmatprep.subr.bf16.mxu0 0
    %2258 = vmatpush1.bf16.msra.mxu0 %v1297
    %2259 = vmatprep.subr.bf16.mxu0 0
    %2260 = vmatpush1.bf16.msra.mxu0 %v1296
    %2261 = vmatprep.subr.bf16.mxu0 0
    %2262 = vmatpush1.bf16.msra.mxu0 %v1295
    %2263 = vmatprep.subr.bf16.mxu0 0
    %2264 = vmatpush1.bf16.msra.mxu0 %v1294
    %2265 = vmatprep.subr.bf16.mxu0 0
    %2266 = vmatpush1.bf16.msra.mxu0 %v1293
    %2267 = vmatprep.subr.bf16.mxu0 0
    %2268 = vmatpush1.bf16.msra.mxu0 %v1292
    %2269 = vmatprep.subr.bf16.mxu0 0
    %2270 = vmatpush2.bf16.msra.mxu0 %v1307
    %2271 = vmatprep.subr.bf16.mxu0 0
    %2272 = vmatpush2.bf16.msra.mxu0 %v1306
    %2273 = vmatprep.subr.bf16.mxu0 0
    %2274 = vmatpush2.bf16.msra.mxu0 %v1305
    %2275 = vmatprep.subr.bf16.mxu0 0
    %2276 = vmatpush2.bf16.msra.mxu0 %v1304
    %2277 = vmatprep.subr.bf16.mxu0 0
    %2278 = vmatpush2.bf16.msra.mxu0 %v1303
    %2279 = vmatprep.subr.bf16.mxu0 0
    %2280 = vmatpush2.bf16.msra.mxu0 %v1302
    %2281 = vmatprep.subr.bf16.mxu0 0
    %2282 = vmatpush2.bf16.msra.mxu0 %v1301
    %2283 = vmatprep.subr.bf16.mxu0 0
    %2284 = vmatpush2.bf16.msra.mxu0 %v1300
    %2285 = vmatprep.mubr.bf16.mxu0 %v1839
    %2286 = vmatmul.mubr.bf16.gmra.mxu0 %v1838
    %v2287 = vpop.f32.mrf.mxu0
    %v2288 = vadd.f32 %v2063, %v2287
    %v2289 = vpop.f32.mrf.mxu0
    %v2290 = vpop.f32.mrf.mxu0
    %v2291 = vadd.f32 %v2066, %v2290
    %v2292 = vpop.f32.mrf.mxu0
    %2293 = vmatprep.mubr.bf16.mxu0 %v1843
    %2294 = vmatmul.mubr.bf16.gmra.mxu0 %v1842
    %v2295 = vpop.f32.mrf.mxu0
    %v2296 = vadd.f32 %v2071, %v2295
    %v2297 = vpop.f32.mrf.mxu0
    %v2298 = vpop.f32.mrf.mxu0
    %v2299 = vadd.f32 %v2074, %v2298
    %v2300 = vpop.f32.mrf.mxu0
    %2301 = vmatprep.mubr.bf16.mxu0 %v1847
    %2302 = vmatmul.mubr.bf16.gmra.mxu0 %v1846
    %v2303 = vpop.f32.mrf.mxu0
    %v2304 = vadd.f32 %v2079, %v2303
    %v2305 = vpop.f32.mrf.mxu0
    %v2306 = vpop.f32.mrf.mxu0
    %v2307 = vadd.f32 %v2082, %v2306
    %v2308 = vpop.f32.mrf.mxu0
    %2309 = vmatprep.mubr.bf16.mxu0 %v1851
    %2310 = vmatmul.mubr.bf16.gmra.mxu0 %v1850
    %v2311 = vpop.f32.mrf.mxu0
    %v2312 = vadd.f32 %v2087, %v2311
    %v2313 = vpop.f32.mrf.mxu0
    %v2314 = vpop.f32.mrf.mxu0
    %v2315 = vadd.f32 %v2090, %v2314
    %v2316 = vpop.f32.mrf.mxu0
    %2317 = vmatprep.mubr.bf16.mxu0 %v1855
    %2318 = vmatmul.mubr.bf16.gmra.mxu0 %v1854
    %v2319 = vpop.f32.mrf.mxu0
    %v2320 = vadd.f32 %v2095, %v2319
    %v2321 = vpop.f32.mrf.mxu0
    %v2322 = vpop.f32.mrf.mxu0
    %v2323 = vadd.f32 %v2098, %v2322
    %v2324 = vpop.f32.mrf.mxu0
    %2325 = vmatprep.mubr.bf16.mxu0 %v1859
    %2326 = vmatmul.mubr.bf16.gmra.mxu0 %v1858
    %v2327 = vpop.f32.mrf.mxu0
    %v2328 = vadd.f32 %v2103, %v2327
    %v2329 = vpop.f32.mrf.mxu0
    %v2330 = vpop.f32.mrf.mxu0
    %v2331 = vadd.f32 %v2106, %v2330
    %v2332 = vpop.f32.mrf.mxu0
    %2333 = vmatprep.mubr.bf16.mxu0 %v1863
    %2334 = vmatmul.mubr.bf16.gmra.mxu0 %v1862
    %v2335 = vpop.f32.mrf.mxu0
    %v2336 = vadd.f32 %v2111, %v2335
    %v2337 = vpop.f32.mrf.mxu0
    %v2338 = vpop.f32.mrf.mxu0
    %v2339 = vadd.f32 %v2114, %v2338
    %v2340 = vpop.f32.mrf.mxu0
    %2341 = vmatprep.mubr.bf16.mxu0 %v1867
    %2342 = vmatmul.mubr.bf16.gmra.mxu0 %v1866
    %v2343 = vpop.f32.mrf.mxu0
    %v2344 = vadd.f32 %v2119, %v2343
    %v2345 = vpop.f32.mrf.mxu0
    %v2346 = vpop.f32.mrf.mxu0
    %v2347 = vadd.f32 %v2122, %v2346
    %v2348 = vpop.f32.mrf.mxu0
    %2349 = vmatprep.mubr.bf16.mxu0 %v1871
    %2350 = vmatmul.mubr.bf16.gmra.mxu0 %v1870
    %v2351 = vpop.f32.mrf.mxu0
    %v2352 = vadd.f32 %v2127, %v2351
    %v2353 = vpop.f32.mrf.mxu0
    %v2354 = vpop.f32.mrf.mxu0
    %v2355 = vadd.f32 %v2130, %v2354
    %v2356 = vpop.f32.mrf.mxu0
    %2357 = vmatprep.mubr.bf16.mxu0 %v1875
    %2358 = vmatmul.mubr.bf16.gmra.mxu0 %v1874
    %v2359 = vpop.f32.mrf.mxu0
    %v2360 = vadd.f32 %v2135, %v2359
    %v2361 = vpop.f32.mrf.mxu0
    %v2362 = vpop.f32.mrf.mxu0
    %v2363 = vadd.f32 %v2138, %v2362
    %v2364 = vpop.f32.mrf.mxu0
    %2365 = vmatprep.mubr.bf16.mxu0 %v1879
    %2366 = vmatmul.mubr.bf16.gmra.mxu0 %v1878
    %v2367 = vpop.f32.mrf.mxu0
    %v2368 = vadd.f32 %v2143, %v2367
    %v2369 = vpop.f32.mrf.mxu0
    %v2370 = vpop.f32.mrf.mxu0
    %v2371 = vadd.f32 %v2146, %v2370
    %v2372 = vpop.f32.mrf.mxu0
    %2373 = vmatprep.mubr.bf16.mxu0 %v1883
    %2374 = vmatmul.mubr.bf16.gmra.mxu0 %v1882
    %v2375 = vpop.f32.mrf.mxu0
    %v2376 = vadd.f32 %v2151, %v2375
    %v2377 = vpop.f32.mrf.mxu0
    %v2378 = vpop.f32.mrf.mxu0
    %v2379 = vadd.f32 %v2154, %v2378
    %v2380 = vpop.f32.mrf.mxu0
    %2381 = vmatprep.mubr.bf16.mxu0 %v1887
    %2382 = vmatmul.mubr.bf16.gmra.mxu0 %v1886
    %v2383 = vpop.f32.mrf.mxu0
    %v2384 = vadd.f32 %v2159, %v2383
    %v2385 = vpop.f32.mrf.mxu0
    %v2386 = vpop.f32.mrf.mxu0
    %v2387 = vadd.f32 %v2162, %v2386
    %v2388 = vpop.f32.mrf.mxu0
    %2389 = vmatprep.mubr.bf16.mxu0 %v1891
    %2390 = vmatmul.mubr.bf16.gmra.mxu0 %v1890
    %v2391 = vpop.f32.mrf.mxu0
    %v2392 = vadd.f32 %v2167, %v2391
    %v2393 = vpop.f32.mrf.mxu0
    %v2394 = vpop.f32.mrf.mxu0
    %v2395 = vadd.f32 %v2170, %v2394
    %v2396 = vpop.f32.mrf.mxu0
    %2397 = vmatprep.mubr.bf16.mxu0 %v1895
    %2398 = vmatmul.mubr.bf16.gmra.mxu0 %v1894
    %v2399 = vpop.f32.mrf.mxu0
    %v2400 = vadd.f32 %v2175, %v2399
    %v2401 = vpop.f32.mrf.mxu0
    %v2402 = vpop.f32.mrf.mxu0
    %v2403 = vadd.f32 %v2178, %v2402
    %v2404 = vpop.f32.mrf.mxu0
    %2405 = vmatprep.mubr.bf16.mxu0 %v1899
    %2406 = vmatmul.mubr.bf16.gmra.mxu0 %v1898
    %v2407 = vpop.f32.mrf.mxu0
    %v2408 = vadd.f32 %v2183, %v2407
    %v2409 = vpop.f32.mrf.mxu0
    %v2410 = vpop.f32.mrf.mxu0
    %v2411 = vadd.f32 %v2186, %v2410
    %v2412 = vpop.f32.mrf.mxu0
    %2413 = vmatprep.mubr.bf16.mxu0 %v1903
    %2414 = vmatmul.mubr.bf16.gmra.mxu0 %v1902
    %v2415 = vpop.f32.mrf.mxu0
    %v2416 = vadd.f32 %v2191, %v2415
    %v2417 = vpop.f32.mrf.mxu0
    %v2418 = vpop.f32.mrf.mxu0
    %v2419 = vadd.f32 %v2194, %v2418
    %v2420 = vpop.f32.mrf.mxu0
    %2421 = vmatprep.mubr.bf16.mxu0 %v1907
    %2422 = vmatmul.mubr.bf16.gmra.mxu0 %v1906
    %v2423 = vpop.f32.mrf.mxu0
    %v2424 = vadd.f32 %v2199, %v2423
    %v2425 = vpop.f32.mrf.mxu0
    %v2426 = vpop.f32.mrf.mxu0
    %v2427 = vadd.f32 %v2202, %v2426
    %v2428 = vpop.f32.mrf.mxu0
    %2429 = vmatprep.mubr.bf16.mxu0 %v1911
    %2430 = vmatmul.mubr.bf16.gmra.mxu0 %v1910
    %v2431 = vpop.f32.mrf.mxu0
    %v2432 = vadd.f32 %v2207, %v2431
    %v2433 = vpop.f32.mrf.mxu0
    %v2434 = vpop.f32.mrf.mxu0
    %v2435 = vadd.f32 %v2210, %v2434
    %v2436 = vpop.f32.mrf.mxu0
    %2437 = vmatprep.mubr.bf16.mxu0 %v1915
    %2438 = vmatmul.mubr.bf16.gmra.mxu0 %v1914
    %v2439 = vpop.f32.mrf.mxu0
    %v2440 = vadd.f32 %v2215, %v2439
    %v2441 = vpop.f32.mrf.mxu0
    %v2442 = vpop.f32.mrf.mxu0
    %v2443 = vadd.f32 %v2218, %v2442
    %v2444 = vpop.f32.mrf.mxu0
    %2445 = vmatprep.mubr.bf16.mxu0 %v1919
    %2446 = vmatmul.mubr.bf16.gmra.mxu0 %v1918
    %v2447 = vpop.f32.mrf.mxu0
    %v2448 = vadd.f32 %v2223, %v2447
    %v2449 = vpop.f32.mrf.mxu0
    %v2450 = vpop.f32.mrf.mxu0
    %v2451 = vadd.f32 %v2226, %v2450
    %v2452 = vpop.f32.mrf.mxu0
    %2453 = vmatprep.mubr.bf16.mxu0 %v1923
    %2454 = vmatmul.mubr.bf16.gmra.mxu0 %v1922
    %v2455 = vpop.f32.mrf.mxu0
    %v2456 = vadd.f32 %v2231, %v2455
    %v2457 = vpop.f32.mrf.mxu0
    %v2458 = vpop.f32.mrf.mxu0
    %v2459 = vadd.f32 %v2234, %v2458
    %v2460 = vpop.f32.mrf.mxu0
    %2461 = vmatprep.mubr.bf16.mxu0 %v1927
    %2462 = vmatmul.mubr.bf16.gmra.mxu0 %v1926
    %v2463 = vpop.f32.mrf.mxu0
    %v2464 = vadd.f32 %v2239, %v2463
    %v2465 = vpop.f32.mrf.mxu0
    %v2466 = vpop.f32.mrf.mxu0
    %v2467 = vadd.f32 %v2242, %v2466
    %v2468 = vpop.f32.mrf.mxu0
    %2469 = vmatprep.mubr.bf16.mxu0 %v1931
    %2470 = vmatmul.mubr.bf16.gmra.mxu0 %v1930
    %v2471 = vpop.f32.mrf.mxu0
    %v2472 = vadd.f32 %v2247, %v2471
    %v2473 = vpop.f32.mrf.mxu0
    %v2474 = vpop.f32.mrf.mxu0
    %v2475 = vadd.f32 %v2250, %v2474
    %v2476 = vpop.f32.mrf.mxu0
    %2477 = vdwg.mxu0
    %v2478 = vmax.f32 %v2288, 0.0
    %v2479 = vmax.f32 %v2291, 0.0
    %v2480 = vmax.f32 %v2296, 0.0
    %v2481 = vmax.f32 %v2299, 0.0
    %v2482 = vmax.f32 %v2304, 0.0
    %v2483 = vmax.f32 %v2307, 0.0
    %v2484 = vmax.f32 %v2312, 0.0
    %v2485 = vmax.f32 %v2315, 0.0
    %v2486 = vmax.f32 %v2320, 0.0
    %v2487 = vmax.f32 %v2323, 0.0
    %v2488 = vmax.f32 %v2328, 0.0
    %v2489 = vmax.f32 %v2331, 0.0
    %v2490 = vmax.f32 %v2336, 0.0
    %v2491 = vmax.f32 %v2339, 0.0
    %v2492 = vmax.f32 %v2344, 0.0
    %v2493 = vmax.f32 %v2347, 0.0
    %v2494 = vmax.f32 %v2352, 0.0
    %v2495 = vmax.f32 %v2355, 0.0
    %v2496 = vmax.f32 %v2360, 0.0
    %v2497 = vmax.f32 %v2363, 0.0
    %v2498 = vmax.f32 %v2368, 0.0
    %v2499 = vmax.f32 %v2371, 0.0
    %v2500 = vmax.f32 %v2376, 0.0
    %v2501 = vmax.f32 %v2379, 0.0
    %v2502 = vmax.f32 %v2384, 0.0
    %v2503 = vmax.f32 %v2387, 0.0
    %v2504 = vmax.f32 %v2392, 0.0
    %v2505 = vmax.f32 %v2395, 0.0
    %v2506 = vmax.f32 %v2400, 0.0
    %v2507 = vmax.f32 %v2403, 0.0
    %v2508 = vmax.f32 %v2408, 0.0
    %v2509 = vmax.f32 %v2411, 0.0
    %v2510 = vmax.f32 %v2416, 0.0
    %v2511 = vmax.f32 %v2419, 0.0
    %v2512 = vmax.f32 %v2424, 0.0
    %v2513 = vmax.f32 %v2427, 0.0
    %v2514 = vmax.f32 %v2432, 0.0
    %v2515 = vmax.f32 %v2435, 0.0
    %v2516 = vmax.f32 %v2440, 0.0
    %v2517 = vmax.f32 %v2443, 0.0
    %v2518 = vmax.f32 %v2448, 0.0
    %v2519 = vmax.f32 %v2451, 0.0
    %v2520 = vmax.f32 %v2456, 0.0
    %v2521 = vmax.f32 %v2459, 0.0
    %v2522 = vmax.f32 %v2464, 0.0
    %v2523 = vmax.f32 %v2467, 0.0
    %v2524 = vmax.f32 %v2472, 0.0
    %v2525 = vmax.f32 %v2475, 0.0
    %2527 = vset.pattern.permute.xlu0 0
    %2528 = vperm.xlu0 %2527, %v131
    %v2529 = vpop.permute.xlu0 %2528
    %2532 = vset.pattern.permute.xlu0 0
    %2533 = vperm.xlu0 %2532, %v132
    %v2534 = vpop.permute.xlu0 %2533
    %2537 = vset.pattern.permute.xlu0 0
    %2538 = vperm.xlu0 %2537, %v133
    %v2539 = vpop.permute.xlu0 %2538
    %2542 = vset.pattern.permute.xlu0 0
    %2543 = vperm.xlu0 %2542, %v134
    %v2544 = vpop.permute.xlu0 %2543
    %2547 = vset.pattern.permute.xlu0 0
    %2548 = vperm.xlu0 %2547, %v135
    %v2549 = vpop.permute.xlu0 %2548
    %2552 = vset.pattern.permute.xlu0 0
    %2553 = vperm.xlu0 %2552, %v136
    %v2554 = vpop.permute.xlu0 %2553
    %2557 = vset.pattern.permute.xlu0 0
    %2558 = vperm.xlu0 %2557, %v137
    %v2559 = vpop.permute.xlu0 %2558
    %2562 = vset.pattern.permute.xlu0 0
    %2563 = vperm.xlu0 %2562, %v138
    %v2564 = vpop.permute.xlu0 %2563
    %2567 = vset.pattern.permute.xlu0 0
    %2568 = vperm.xlu0 %2567, %v139
    %v2569 = vpop.permute.xlu0 %2568
    %2572 = vset.pattern.permute.xlu0 0
    %2573 = vperm.xlu0 %2572, %v140
    %v2574 = vpop.permute.xlu0 %2573
    %2577 = vset.pattern.permute.xlu0 0
    %2578 = vperm.xlu0 %2577, %v141
    %v2579 = vpop.permute.xlu0 %2578
    %2582 = vset.pattern.permute.xlu0 0
    %2583 = vperm.xlu0 %2582, %v142
    %v2584 = vpop.permute.xlu0 %2583
    %2587 = vset.pattern.permute.xlu0 0
    %2588 = vperm.xlu0 %2587, %v143
    %v2589 = vpop.permute.xlu0 %2588
    %2592 = vset.pattern.permute.xlu0 0
    %2593 = vperm.xlu0 %2592, %v144
    %v2594 = vpop.permute.xlu0 %2593
    %2597 = vset.pattern.permute.xlu0 0
    %2598 = vperm.xlu0 %2597, %v145
    %v2599 = vpop.permute.xlu0 %2598
    %2602 = vset.pattern.permute.xlu0 0
    %2603 = vperm.xlu0 %2602, %v146
    %v2604 = vpop.permute.xlu0 %2603
    %2607 = vset.pattern.permute.xlu0 0
    %2608 = vperm.xlu0 %2607, %v147
    %v2609 = vpop.permute.xlu0 %2608
    %2612 = vset.pattern.permute.xlu0 0
    %2613 = vperm.xlu0 %2612, %v148
    %v2614 = vpop.permute.xlu0 %2613
    %2617 = vset.pattern.permute.xlu0 0
    %2618 = vperm.xlu0 %2617, %v149
    %v2619 = vpop.permute.xlu0 %2618
    %2622 = vset.pattern.permute.xlu0 0
    %2623 = vperm.xlu0 %2622, %v150
    %v2624 = vpop.permute.xlu0 %2623
    %2627 = vset.pattern.permute.xlu0 0
    %2628 = vperm.xlu0 %2627, %v151
    %v2629 = vpop.permute.xlu0 %2628
    %2632 = vset.pattern.permute.xlu0 0
    %2633 = vperm.xlu0 %2632, %v152
    %v2634 = vpop.permute.xlu0 %2633
    %2637 = vset.pattern.permute.xlu0 0
    %2638 = vperm.xlu0 %2637, %v153
    %v2639 = vpop.permute.xlu0 %2638
    %2642 = vset.pattern.permute.xlu0 0
    %2643 = vperm.xlu0 %2642, %v154
    %v2644 = vpop.permute.xlu0 %2643
    %2647 = vset.pattern.permute.xlu0 0
    %2648 = vperm.xlu0 %2647, %v155
    %v2649 = vpop.permute.xlu0 %2648
    %2652 = vset.pattern.permute.xlu0 0
    %2653 = vperm.xlu0 %2652, %v156
    %v2654 = vpop.permute.xlu0 %2653
    %2657 = vset.pattern.permute.xlu0 0
    %2658 = vperm.xlu0 %2657, %v157
    %v2659 = vpop.permute.xlu0 %2658
    %2662 = vset.pattern.permute.xlu0 0
    %2663 = vperm.xlu0 %2662, %v158
    %v2664 = vpop.permute.xlu0 %2663
    %2667 = vset.pattern.permute.xlu0 0
    %2668 = vperm.xlu0 %2667, %v159
    %v2669 = vpop.permute.xlu0 %2668
    %2672 = vset.pattern.permute.xlu0 0
    %2673 = vperm.xlu0 %2672, %v160
    %v2674 = vpop.permute.xlu0 %2673
    %2677 = vset.pattern.permute.xlu0 0
    %2678 = vperm.xlu0 %2677, %v161
    %v2679 = vpop.permute.xlu0 %2678
    %2682 = vset.pattern.permute.xlu0 0
    %2683 = vperm.xlu0 %2682, %v162
    %v2684 = vpop.permute.xlu0 %2683
    %2687 = vset.pattern.permute.xlu0 0
    %2688 = vperm.xlu0 %2687, %v163
    %v2689 = vpop.permute.xlu0 %2688
    %2692 = vset.pattern.permute.xlu0 0
    %2693 = vperm.xlu0 %2692, %v164
    %v2694 = vpop.permute.xlu0 %2693
    %2697 = vset.pattern.permute.xlu0 0
    %2698 = vperm.xlu0 %2697, %v165
    %v2699 = vpop.permute.xlu0 %2698
    %2702 = vset.pattern.permute.xlu0 0
    %2703 = vperm.xlu0 %2702, %v166
    %v2704 = vpop.permute.xlu0 %2703
    %2707 = vset.pattern.permute.xlu0 0
    %2708 = vperm.xlu0 %2707, %v167
    %v2709 = vpop.permute.xlu0 %2708
    %2712 = vset.pattern.permute.xlu0 0
    %2713 = vperm.xlu0 %2712, %v168
    %v2714 = vpop.permute.xlu0 %2713
    %2717 = vset.pattern.permute.xlu0 0
    %2718 = vperm.xlu0 %2717, %v169
    %v2719 = vpop.permute.xlu0 %2718
    %2722 = vset.pattern.permute.xlu0 0
    %2723 = vperm.xlu0 %2722, %v170
    %v2724 = vpop.permute.xlu0 %2723
    %2727 = vset.pattern.permute.xlu0 0
    %2728 = vperm.xlu0 %2727, %v171
    %v2729 = vpop.permute.xlu0 %2728
    %2732 = vset.pattern.permute.xlu0 0
    %2733 = vperm.xlu0 %2732, %v172
    %v2734 = vpop.permute.xlu0 %2733
    %2737 = vset.pattern.permute.xlu0 0
    %2738 = vperm.xlu0 %2737, %v173
    %v2739 = vpop.permute.xlu0 %2738
    %2742 = vset.pattern.permute.xlu0 0
    %2743 = vperm.xlu0 %2742, %v174
    %v2744 = vpop.permute.xlu0 %2743
    %2747 = vset.pattern.permute.xlu0 0
    %2748 = vperm.xlu0 %2747, %v175
    %v2749 = vpop.permute.xlu0 %2748
    %2752 = vset.pattern.permute.xlu0 0
    %2753 = vperm.xlu0 %2752, %v176
    %v2754 = vpop.permute.xlu0 %2753
    %2757 = vset.pattern.permute.xlu0 0
    %2758 = vperm.xlu0 %2757, %v177
    %v2759 = vpop.permute.xlu0 %2758
    %2762 = vset.pattern.permute.xlu0 0
    %2763 = vperm.xlu0 %2762, %v178
    %v2764 = vpop.permute.xlu0 %2763
    %v2766 = vmul.f32 %v2478, %v2529
    %v2767 = vmul.f32 %v2479, %v2534
    %v2768 = vmul.f32 %v2480, %v2539
    %v2769 = vmul.f32 %v2481, %v2544
    %v2770 = vmul.f32 %v2482, %v2549
    %v2771 = vmul.f32 %v2483, %v2554
    %v2772 = vmul.f32 %v2484, %v2559
    %v2773 = vmul.f32 %v2485, %v2564
    %v2774 = vmul.f32 %v2486, %v2569
    %v2775 = vmul.f32 %v2487, %v2574
    %v2776 = vmul.f32 %v2488, %v2579
    %v2777 = vmul.f32 %v2489, %v2584
    %v2778 = vmul.f32 %v2490, %v2589
    %v2779 = vmul.f32 %v2491, %v2594
    %v2780 = vmul.f32 %v2492, %v2599
    %v2781 = vmul.f32 %v2493, %v2604
    %v2782 = vmul.f32 %v2494, %v2609
    %v2783 = vmul.f32 %v2495, %v2614
    %v2784 = vmul.f32 %v2496, %v2619
    %v2785 = vmul.f32 %v2497, %v2624
    %v2786 = vmul.f32 %v2498, %v2629
    %v2787 = vmul.f32 %v2499, %v2634
    %v2788 = vmul.f32 %v2500, %v2639
    %v2789 = vmul.f32 %v2501, %v2644
    %v2790 = vmul.f32 %v2502, %v2649
    %v2791 = vmul.f32 %v2503, %v2654
    %v2792 = vmul.f32 %v2504, %v2659
    %v2793 = vmul.f32 %v2505, %v2664
    %v2794 = vmul.f32 %v2506, %v2669
    %v2795 = vmul.f32 %v2507, %v2674
    %v2796 = vmul.f32 %v2508, %v2679
    %v2797 = vmul.f32 %v2509, %v2684
    %v2798 = vmul.f32 %v2510, %v2689
    %v2799 = vmul.f32 %v2511, %v2694
    %v2800 = vmul.f32 %v2512, %v2699
    %v2801 = vmul.f32 %v2513, %v2704
    %v2802 = vmul.f32 %v2514, %v2709
    %v2803 = vmul.f32 %v2515, %v2714
    %v2804 = vmul.f32 %v2516, %v2719
    %v2805 = vmul.f32 %v2517, %v2724
    %v2806 = vmul.f32 %v2518, %v2729
    %v2807 = vmul.f32 %v2519, %v2734
    %v2808 = vmul.f32 %v2520, %v2739
    %v2809 = vmul.f32 %v2521, %v2744
    %v2810 = vmul.f32 %v2522, %v2749
    %v2811 = vmul.f32 %v2523, %v2754
    %v2812 = vmul.f32 %v2524, %v2759
    %v2813 = vmul.f32 %v2525, %v2764
    %v2814 = vadd.f32 %v2766, %v2767
    %v2815 = vadd.f32 %v2814, %v2768
    %v2816 = vadd.f32 %v2815, %v2769
    %v2817 = vadd.f32 %v2816, %v2770
    %v2818 = vadd.f32 %v2817, %v2771
    %v2819 = vadd.f32 %v2818, %v2772
    %v2820 = vadd.f32 %v2819, %v2773
    %v2821 = vadd.f32 %v2820, %v2774
    %v2822 = vadd.f32 %v2821, %v2775
    %v2823 = vadd.f32 %v2822, %v2776
    %v2824 = vadd.f32 %v2823, %v2777
    %v2825 = vadd.f32 %v2824, %v2778
    %v2826 = vadd.f32 %v2825, %v2779
    %v2827 = vadd.f32 %v2826, %v2780
    %v2828 = vadd.f32 %v2827, %v2781
    %v2829 = vadd.f32 %v2828, %v2782
    %v2830 = vadd.f32 %v2829, %v2783
    %v2831 = vadd.f32 %v2830, %v2784
    %v2832 = vadd.f32 %v2831, %v2785
    %v2833 = vadd.f32 %v2832, %v2786
    %v2834 = vadd.f32 %v2833, %v2787
    %v2835 = vadd.f32 %v2834, %v2788
    %v2836 = vadd.f32 %v2835, %v2789
    %v2837 = vadd.f32 %v2836, %v2790
    %v2838 = vadd.f32 %v2837, %v2791
    %v2839 = vadd.f32 %v2838, %v2792
    %v2840 = vadd.f32 %v2839, %v2793
    %v2841 = vadd.f32 %v2840, %v2794
    %v2842 = vadd.f32 %v2841, %v2795
    %v2843 = vadd.f32 %v2842, %v2796
    %v2844 = vadd.f32 %v2843, %v2797
    %v2845 = vadd.f32 %v2844, %v2798
    %v2846 = vadd.f32 %v2845, %v2799
    %v2847 = vadd.f32 %v2846, %v2800
    %v2848 = vadd.f32 %v2847, %v2801
    %v2849 = vadd.f32 %v2848, %v2802
    %v2850 = vadd.f32 %v2849, %v2803
    %v2851 = vadd.f32 %v2850, %v2804
    %v2852 = vadd.f32 %v2851, %v2805
    %v2853 = vadd.f32 %v2852, %v2806
    %v2854 = vadd.f32 %v2853, %v2807
    %v2855 = vadd.f32 %v2854, %v2808
    %v2856 = vadd.f32 %v2855, %v2809
    %v2857 = vadd.f32 %v2856, %v2810
    %v2858 = vadd.f32 %v2857, %v2811
    %v2859 = vadd.f32 %v2858, %v2812
    %v2860 = vadd.f32 %v2859, %v2813
    %v2861 = vrot.slane %v2860, 4
    %v2862 = vadd.f32 %v2860, %v2861
    %v2863 = vrot.slane %v2862, 2
    %v2864 = vadd.f32 %v2862, %v2863
    %v2865 = vrot.slane %v2864, 1
    %v2866 = vadd.f32 %v2864, %v2865
    %2868 = vset.pattern.permute.xlu0 0
    %2869 = vperm.xlu0 %2868, %v179
    %v2870 = vpop.permute.xlu0 %2869
    %v2872 = vadd.f32 %v2866, %v2870
    %2873 = vst [vmem:[#allocation2] sm:$0x1] %v2872
    // Predicated region
    $region18: #{tpu_custom_call.1} parent=1 // pred_check
      _
    $region19: #{tpu_custom_call.1} parent=1 // pred_check_branch
      %2875 = sbr.rel (0) target = $region21
    $region20: #{tpu_custom_call.1} parent=1 // pred_region
      %s2877 = ssub.s32 16, 16
      %2878 = vsyncadd [#allocation3], %s2877
      %s2880 = sshll.u32 [#allocation2], 4
      %s2881 = int_to_ptr.vmem [resolvable:$true] %s2880
      %2883 = dma.vmem_to_hbm [thread:$0]  %s2881, 16, %s4, [#allocation3]
    $region21: #{tpu_custom_call.1} parent=1 // pred_fallthru
      _
    // Predicated region
    $region22: #{tpu_custom_call.1} parent=1 // pred_check
      _
    $region23: #{tpu_custom_call.1} parent=1 // pred_check_branch
      %2885 = sbr.rel (0) target = $region25
    $region24: #{tpu_custom_call.1} parent=1 // pred_region
      %2886 = dma.done [#allocation3], 16
    $region25: #{tpu_custom_call.1} parent=1 // pred_fallthru
      _
    %2887 = vsyncpa [#allocation3], 1

</llo_original>
